<compile_context>
chip_gen: v5e
topology: v5e:2x2
jax: 0.10.0
libtpu: 0.0.40
codegen_flags: <defaults>
</compile_context>

<pallas_src>
import functools

import jax
import jax.numpy as jnp
from jax.experimental import pallas as pl
from jax.experimental.pallas import tpu as pltpu


def _round_up(x, m):
    return (x + m - 1) // m * m


# --------------------------------------------------------------------------
# Fused ResidualBlock kernel (one image per grid step)
# --------------------------------------------------------------------------
def _make_residual_block_kernel(cpi, cpo, cb, K, pad, H, W, off0, LB):
    HW = H * W

    def kernel(x_ref, w1_ref, s1_ref, b1_ref, w2_ref, s2_ref, b2_ref,
               o_ref, mbuf_ref):
        # ---- per-kw column-wrap masks, built in-kernel (no HBM mask input) ----
        # For tap shift d = kw - pad, the pixel stored at column c' is read by
        # output column c = c' - d; the read is a horizontal wrap (must be zero)
        # iff c' - d is outside [0, W).
        iota = jax.lax.broadcasted_iota(jnp.int32, (1, HW), 1)
        col = (iota & (W - 1)) if (W & (W - 1)) == 0 else (iota % W)
        masks = []
        for kw in range(K):
            d = kw - pad
            if d == 0:
                masks.append(None)                    # centre tap never wraps
            else:
                rd = col - d
                masks.append(jnp.where((rd >= 0) & (rd < W), 1.0, 0.0))

        # ---- zero only the two lane-aligned halo slabs (not the whole buffer) --
        if off0 > 0:
            for kw in range(K):
                mbuf_ref[kw, :, :off0] = jnp.zeros((cb, off0), jnp.float32)
                mbuf_ref[kw, :, off0 + HW:] = jnp.zeros(
                    (cb, LB - off0 - HW), jnp.float32)

        def load_masked(vals, c):
            # K pre-masked copies of the image; the kw mask is applied ONCE per kw
            # at copy-in instead of once per (ci, kh, kw) tap.
            for kw in range(K):
                m = masks[kw]
                v = vals if m is None else vals * m
                mbuf_ref[kw, :c, off0:off0 + HW] = v    # 128-lane aligned store

        def conv_bn_relu(w_ref, scale_ref, shift_ref, cin, cout):
            # K*K small MXU dots (cout,cin)@(cin,HW); channels padded to 8 so
            # every operand is full-sublane.  Accumulate in f32 vregs.
            acc = jnp.zeros((cout, HW), jnp.float32)
            for kh in range(K):
                for kw in range(K):
                    start = off0 + (kh - pad) * W + (kw - pad)     # static
                    win = mbuf_ref[kw, :cin, start:start + HW]     # pre-masked
                    acc = acc + jnp.dot(w_ref[kh * K + kw], win,
                                        preferred_element_type=jnp.float32)
            return jnp.maximum(acc * scale_ref[...] + shift_ref[...], 0.0)

        # conv1 -> BN1 -> ReLU  (intermediate never leaves VMEM/vregs)
        load_masked(x_ref[0], cpi)
        y1 = conv_bn_relu(w1_ref, s1_ref, b1_ref, cpi, cpo)

        # conv2 -> BN2 -> final F.relu
        load_masked(y1, cpo)
        y2 = conv_bn_relu(w2_ref, s2_ref, b2_ref, cpo, cpo)

        # lane-dense, full-sublane (cpo, HW) output store
        o_ref[0] = y2

    return kernel


# --------------------------------------------------------------------------
# Wrapper
# --------------------------------------------------------------------------
def residual_block_apply(params, x, *, stride=1, padding=1, bn_eps=1e-5):
    """x: (N, C_in, H, W) float32 -> (N, C_out, H, W) float32."""
    N, C_in, H, W = x.shape
    w1 = params["conv1_w"]
    C_out, _, K, K2 = w1.shape
    w2 = params["conv2_w"]
    assert K == K2 and w2.shape == (C_out, C_out, K, K)
    assert stride == 1, "TODO(synk): stride > 1 not implemented"
    assert 2 * padding == K - 1, "only 'same' convs (odd K, padding=(K-1)//2)"

    HW = H * W

    # Channels padded to a full 8-sublane tile: fills vregs, well-shaped MXU taps.
    CPI = _round_up(C_in, 8)
    CPO = _round_up(C_out, 8)
    CB = max(CPI, CPO)

    # Lane-aligned halo: image data starts at a 128-lane boundary in the buffer.
    halo = padding * (W + 1)
    off0 = _round_up(halo, 128) if halo > 0 else 0
    LB = off0 + HW + off0

    # Fold conv bias + BatchNorm (inference running stats) into scale/shift.
    def fold(b, gamma, beta, mean, var):
        scale = gamma * jax.lax.rsqrt(var + bn_eps)
        shift = (b - mean) * scale + beta
        scale = jnp.pad(scale, (0, CPO - C_out))      # padded channels -> 0
        shift = jnp.pad(shift, (0, CPO - C_out))
        return scale.reshape(CPO, 1), shift.reshape(CPO, 1)

    s1, sh1 = fold(params["conv1_b"], params["bn1_gamma"], params["bn1_beta"],
                   params["bn1_mean"], params["bn1_var"])
    s2, sh2 = fold(params["conv2_b"], params["bn2_gamma"], params["bn2_beta"],
                   params["bn2_mean"], params["bn2_var"])

    def prep_w(w, cpo, cpi):
        co, ci = w.shape[0], w.shape[1]
        w = jnp.pad(w, ((0, cpo - co), (0, cpi - ci), (0, 0), (0, 0)))
        # (co, ci, kh, kw) -> (kh*K + kw, cpo, cpi): one (cpo, cpi) MXU tap each.
        return jnp.transpose(w, (2, 3, 0, 1)).reshape(K * K, cpo, cpi)

    w1p = prep_w(w1, CPO, CPI)
    w2p = prep_w(w2, CPO, CPO)
    x_p = jnp.pad(x, ((0, 0), (0, CPI - C_in), (0, 0), (0, 0))).reshape(N, CPI, HW)

    kernel = _make_residual_block_kernel(CPI, CPO, CB, K, padding, H, W, off0, LB)

    out = pl.pallas_call(
        kernel,
        out_shape=jax.ShapeDtypeStruct((N, CPO, HW), jnp.float32),
        grid=(N,),   # one image per step: 2 'parallel' steps keep both v7x TCs busy
        in_specs=[
            pl.BlockSpec((1, CPI, HW), lambda n: (n, 0, 0)),          # image n
            pl.BlockSpec((K * K, CPO, CPI), lambda n: (0, 0, 0)),     # w1 taps
            pl.BlockSpec((CPO, 1), lambda n: (0, 0)),                 # bn1 scale
            pl.BlockSpec((CPO, 1), lambda n: (0, 0)),                 # bn1 shift
            pl.BlockSpec((K * K, CPO, CPO), lambda n: (0, 0, 0)),     # w2 taps
            pl.BlockSpec((CPO, 1), lambda n: (0, 0)),                 # bn2 scale
            pl.BlockSpec((CPO, 1), lambda n: (0, 0)),                 # bn2 shift
        ],
        out_specs=pl.BlockSpec((1, CPO, HW), lambda n: (n, 0, 0)),
        scratch_shapes=[pltpu.VMEM((K, CB, LB), jnp.float32)],        # ~48 KiB
        compiler_params=pltpu.CompilerParams(
            dimension_semantics=("parallel",)),
    )(x_p, w1p, s1, sh1, w2p, s2, sh2)

    return out[:, :C_out, :].reshape(N, C_out, H, W)


# --------------------------------------------------------------------------
# Pure-JAX reference (XLA conv) for correctness checking
# --------------------------------------------------------------------------
def residual_block_reference(params, x, *, stride=1, padding=1, bn_eps=1e-5):
    def conv_bn(z, w, b, gamma, beta, mean, var):
        y = jax.lax.conv_general_dilated(
            z, w, window_strides=(stride, stride),
            padding=[(padding, padding), (padding, padding)],
            dimension_numbers=("NCHW", "OIHW", "NCHW"),
            precision=jax.lax.Precision.HIGHEST)
        y = y + b[None, :, None, None]
        inv = jax.lax.rsqrt(var + bn_eps)[None, :, None, None]
        y = (y - mean[None, :, None, None]) * inv
        return y * gamma[None, :, None, None] + beta[None, :, None, None]

    h = conv_bn(x, params["conv1_w"], params["conv1_b"], params["bn1_gamma"],
                params["bn1_beta"], params["bn1_mean"], params["bn1_var"])
    h = jnp.maximum(h, 0.0)
    h = conv_bn(h, params["conv2_w"], params["conv2_b"], params["bn2_gamma"],
                params["bn2_beta"], params["bn2_mean"], params["bn2_var"])
    return jnp.maximum(h, 0.0)        # F.relu(self.left(x)); shortcut unused


# --------------------------------------------------------------------------
# Parameter init (deterministic; BN running stats at PyTorch defaults)
# --------------------------------------------------------------------------
def init_residual_block_params(key, c_in, c_out, k):
    ks = jax.random.split(key, 8)
    fan1 = c_in * k * k
    fan2 = c_out * k * k
    return {
        "conv1_w": jax.random.normal(ks[0], (c_out, c_in, k, k), jnp.float32) / jnp.sqrt(fan1),
        "conv1_b": 0.1 * jax.random.normal(ks[1], (c_out,), jnp.float32),
        "bn1_gamma": 1.0 + 0.1 * jax.random.normal(ks[2], (c_out,), jnp.float32),
        "bn1_beta": 0.1 * jax.random.normal(ks[3], (c_out,), jnp.float32),
        "bn1_mean": jnp.zeros((c_out,), jnp.float32),
        "bn1_var": jnp.ones((c_out,), jnp.float32),
        "conv2_w": jax.random.normal(ks[4], (c_out, c_out, k, k), jnp.float32) / jnp.sqrt(fan2),
        "conv2_b": 0.1 * jax.random.normal(ks[5], (c_out,), jnp.float32),
        "bn2_gamma": 1.0 + 0.1 * jax.random.normal(ks[6], (c_out,), jnp.float32),
        "bn2_beta": 0.1 * jax.random.normal(ks[7], (c_out,), jnp.float32),
        "bn2_mean": jnp.zeros((c_out,), jnp.float32),
        "bn2_var": jnp.ones((c_out,), jnp.float32),
    }


# --------------------------------------------------------------------------
if __name__ == "__main__":
    key = jax.random.PRNGKey(0)
    k_x, k_p = jax.random.split(key)

    N, C_in, C_out, H, W = 2, 4, 4, 16, 16
    K, stride, padding = 3, 1, 1            # static Python ints (never traced)

    x = jax.random.normal(k_x, (N, C_in, H, W), dtype=jnp.float32)
    params = init_residual_block_params(k_p, C_in, C_out, K)

    fwd = jax.jit(functools.partial(residual_block_apply,
                                    stride=stride, padding=padding))
    out = jax.block_until_ready(fwd(params, x))

    assert out.shape == (N, C_out, H, W), out.shape
    assert out.dtype == jnp.float32
    assert bool(jnp.all(jnp.isfinite(out)))

    ref = residual_block_reference(params, x, stride=stride, padding=padding)
    err = float(jnp.max(jnp.abs(out - ref)))
    # Tolerance accounts for the MXU's f32 matmul possibly running as bf16-pass
    # decompositions at DEFAULT precision; indexing/structural bugs show up as
    # O(1) errors, so this still discriminates correct from broken.
    assert err < 2e-2, f"mismatch vs XLA reference: max abs err = {err}"

    print("KERNEL_OK")
</pallas_src>

<mosaic_0001>
module attributes {stable_mosaic.version = 11 : i64} {
  func.func @kernel(%arg0: i32, %arg1: memref<1x8x256xf32, #tpu.memory_space<vmem>>, %arg2: memref<9x8x8xf32, #tpu.memory_space<vmem>>, %arg3: memref<8x1xf32, #tpu.memory_space<vmem>>, %arg4: memref<8x1xf32, #tpu.memory_space<vmem>>, %arg5: memref<9x8x8xf32, #tpu.memory_space<vmem>>, %arg6: memref<8x1xf32, #tpu.memory_space<vmem>>, %arg7: memref<8x1xf32, #tpu.memory_space<vmem>>, %arg8: memref<1x8x256xf32, #tpu.memory_space<vmem>>, %arg9: memref<3x8x512xf32, #tpu.memory_space<vmem>>) attributes {dimension_semantics = [#tpu.dimension_semantics<parallel>], iteration_bounds = array<i64: 2>, scalar_prefetch = 0 : i64, scratch_operands = 1 : i64, tpu.core_type = #tpu.core_type<tc>, window_params = [{transform_indices = @transform_0, window_bounds = array<i64: 1, 8, 256>}, {pipeline_mode = #tpu.pipeline_mode<synchronous>, transform_indices = @transform_1, window_bounds = array<i64: 9, 8, 8>}, {pipeline_mode = #tpu.pipeline_mode<synchronous>, transform_indices = @transform_2, window_bounds = array<i64: 8, 1>}, {pipeline_mode = #tpu.pipeline_mode<synchronous>, transform_indices = @transform_3, window_bounds = array<i64: 8, 1>}, {pipeline_mode = #tpu.pipeline_mode<synchronous>, transform_indices = @transform_4, window_bounds = array<i64: 9, 8, 8>}, {pipeline_mode = #tpu.pipeline_mode<synchronous>, transform_indices = @transform_5, window_bounds = array<i64: 8, 1>}, {pipeline_mode = #tpu.pipeline_mode<synchronous>, transform_indices = @transform_6, window_bounds = array<i64: 8, 1>}, {transform_indices = @transform_7, window_bounds = array<i64: 1, 8, 256>}]} {
    %0 = tpu.iota {dimensions = array<i32: 1>} : vector<1x256xi32>
    %c15_i32 = arith.constant 15 : i32
    %1 = vector.broadcast %c15_i32 : i32 to vector<1x256xi32>
    %2 = arith.andi %0, %1 : vector<1x256xi32>
    %c-1_i32 = arith.constant -1 : i32
    %3 = vector.broadcast %c-1_i32 : i32 to vector<1x256xi32>
    %4 = arith.subi %2, %3 : vector<1x256xi32>
    %c0_i32 = arith.constant 0 : i32
    %5 = vector.broadcast %c0_i32 : i32 to vector<1x256xi32>
    %6 = arith.cmpi sge, %4, %5 : vector<1x256xi32>
    %c16_i32 = arith.constant 16 : i32
    %7 = vector.broadcast %c16_i32 : i32 to vector<1x256xi32>
    %8 = arith.cmpi slt, %4, %7 : vector<1x256xi32>
    %9 = arith.andi %6, %8 : vector<1x256xi1>
    %cst = arith.constant 1.000000e+00 : f32
    %cst_0 = arith.constant 0.000000e+00 : f32
    %10 = vector.broadcast %cst : f32 to vector<1x256xf32>
    %11 = vector.broadcast %cst_0 : f32 to vector<1x256xf32>
    %12 = arith.select %9, %10, %11 : vector<1x256xi1>, vector<1x256xf32>
    %c1_i32 = arith.constant 1 : i32
    %13 = vector.broadcast %c1_i32 : i32 to vector<1x256xi32>
    %14 = arith.subi %2, %13 : vector<1x256xi32>
    %c0_i32_1 = arith.constant 0 : i32
    %15 = vector.broadcast %c0_i32_1 : i32 to vector<1x256xi32>
    %16 = arith.cmpi sge, %14, %15 : vector<1x256xi32>
    %c16_i32_2 = arith.constant 16 : i32
    %17 = vector.broadcast %c16_i32_2 : i32 to vector<1x256xi32>
    %18 = arith.cmpi slt, %14, %17 : vector<1x256xi32>
    %19 = arith.andi %16, %18 : vector<1x256xi1>
    %cst_3 = arith.constant 1.000000e+00 : f32
    %cst_4 = arith.constant 0.000000e+00 : f32
    %20 = vector.broadcast %cst_3 : f32 to vector<1x256xf32>
    %21 = vector.broadcast %cst_4 : f32 to vector<1x256xf32>
    %22 = arith.select %19, %20, %21 : vector<1x256xi1>, vector<1x256xf32>
    %cst_5 = arith.constant 0.000000e+00 : f32
    %23 = vector.broadcast %cst_5 : f32 to vector<8x128xf32>
    %c0 = arith.constant 0 : index
    %c0_6 = arith.constant 0 : index
    %c0_7 = arith.constant 0 : index
    %24 = vector.load %arg9[%c0, %c0_6, %c0_7] : memref<3x8x512xf32, #tpu.memory_space<vmem>>, vector<1x8x128xf32>
    %25 = vector.shape_cast %24 : vector<1x8x128xf32> to vector<8x128xf32>
    %26 = vector.shape_cast %23 : vector<8x128xf32> to vector<1x8x128xf32>
    tpu.vector_store %arg9[%c0, %c0_6, %c0_7], %26 {strides = array<i32>} : memref<3x8x512xf32, #tpu.memory_space<vmem>>, vector<1x8x128xf32>,
    %cst_8 = arith.constant 0.000000e+00 : f32
    %27 = vector.broadcast %cst_8 : f32 to vector<8x128xf32>
    %c0_9 = arith.constant 0 : index
    %c0_10 = arith.constant 0 : index
    %c384 = arith.constant 384 : index
    %28 = vector.load %arg9[%c0_9, %c0_10, %c384] : memref<3x8x512xf32, #tpu.memory_space<vmem>>, vector<1x8x128xf32>
    %29 = vector.shape_cast %28 : vector<1x8x128xf32> to vector<8x128xf32>
    %30 = vector.shape_cast %27 : vector<8x128xf32> to vector<1x8x128xf32>
    tpu.vector_store %arg9[%c0_9, %c0_10, %c384], %30 {strides = array<i32>} : memref<3x8x512xf32, #tpu.memory_space<vmem>>, vector<1x8x128xf32>,
    %cst_11 = arith.constant 0.000000e+00 : f32
    %31 = vector.broadcast %cst_11 : f32 to vector<8x128xf32>
    %c1 = arith.constant 1 : index
    %c0_12 = arith.constant 0 : index
    %c0_13 = arith.constant 0 : index
    %32 = vector.load %arg9[%c1, %c0_12, %c0_13] : memref<3x8x512xf32, #tpu.memory_space<vmem>>, vector<1x8x128xf32>
    %33 = vector.shape_cast %32 : vector<1x8x128xf32> to vector<8x128xf32>
    %34 = vector.shape_cast %31 : vector<8x128xf32> to vector<1x8x128xf32>
    tpu.vector_store %arg9[%c1, %c0_12, %c0_13], %34 {strides = array<i32>} : memref<3x8x512xf32, #tpu.memory_space<vmem>>, vector<1x8x128xf32>,
    %cst_14 = arith.constant 0.000000e+00 : f32
    %35 = vector.broadcast %cst_14 : f32 to vector<8x128xf32>
    %c1_15 = arith.constant 1 : index
    %c0_16 = arith.constant 0 : index
    %c384_17 = arith.constant 384 : index
    %36 = vector.load %arg9[%c1_15, %c0_16, %c384_17] : memref<3x8x512xf32, #tpu.memory_space<vmem>>, vector<1x8x128xf32>
    %37 = vector.shape_cast %36 : vector<1x8x128xf32> to vector<8x128xf32>
    %38 = vector.shape_cast %35 : vector<8x128xf32> to vector<1x8x128xf32>
    tpu.vector_store %arg9[%c1_15, %c0_16, %c384_17], %38 {strides = array<i32>} : memref<3x8x512xf32, #tpu.memory_space<vmem>>, vector<1x8x128xf32>,
    %cst_18 = arith.constant 0.000000e+00 : f32
    %39 = vector.broadcast %cst_18 : f32 to vector<8x128xf32>
    %c2 = arith.constant 2 : index
    %c0_19 = arith.constant 0 : index
    %c0_20 = arith.constant 0 : index
    %40 = vector.load %arg9[%c2, %c0_19, %c0_20] : memref<3x8x512xf32, #tpu.memory_space<vmem>>, vector<1x8x128xf32>
    %41 = vector.shape_cast %40 : vector<1x8x128xf32> to vector<8x128xf32>
    %42 = vector.shape_cast %39 : vector<8x128xf32> to vector<1x8x128xf32>
    tpu.vector_store %arg9[%c2, %c0_19, %c0_20], %42 {strides = array<i32>} : memref<3x8x512xf32, #tpu.memory_space<vmem>>, vector<1x8x128xf32>,
    %cst_21 = arith.constant 0.000000e+00 : f32
    %43 = vector.broadcast %cst_21 : f32 to vector<8x128xf32>
    %c2_22 = arith.constant 2 : index
    %c0_23 = arith.constant 0 : index
    %c384_24 = arith.constant 384 : index
    %44 = vector.load %arg9[%c2_22, %c0_23, %c384_24] : memref<3x8x512xf32, #tpu.memory_space<vmem>>, vector<1x8x128xf32>
    %45 = vector.shape_cast %44 : vector<1x8x128xf32> to vector<8x128xf32>
    %46 = vector.shape_cast %43 : vector<8x128xf32> to vector<1x8x128xf32>
    tpu.vector_store %arg9[%c2_22, %c0_23, %c384_24], %46 {strides = array<i32>} : memref<3x8x512xf32, #tpu.memory_space<vmem>>, vector<1x8x128xf32>,
    %c0_25 = arith.constant 0 : index
    %c0_26 = arith.constant 0 : index
    %c0_27 = arith.constant 0 : index
    %47 = vector.load %arg1[%c0_25, %c0_26, %c0_27] : memref<1x8x256xf32, #tpu.memory_space<vmem>>, vector<1x8x256xf32>
    %48 = vector.shape_cast %47 : vector<1x8x256xf32> to vector<8x256xf32>
    %49 = vector.broadcast %12 : vector<1x256xf32> to vector<8x256xf32>
    %50 = arith.mulf %48, %49 : vector<8x256xf32>
    %c0_28 = arith.constant 0 : index
    %c0_29 = arith.constant 0 : index
    %c128 = arith.constant 128 : index
    %51 = vector.load %arg9[%c0_28, %c0_29, %c128] : memref<3x8x512xf32, #tpu.memory_space<vmem>>, vector<1x8x256xf32>
    %52 = vector.shape_cast %51 : vector<1x8x256xf32> to vector<8x256xf32>
    %53 = vector.shape_cast %50 : vector<8x256xf32> to vector<1x8x256xf32>
    tpu.vector_store %arg9[%c0_28, %c0_29, %c128], %53 {strides = array<i32>} : memref<3x8x512xf32, #tpu.memory_space<vmem>>, vector<1x8x256xf32>,
    %c1_30 = arith.constant 1 : index
    %c0_31 = arith.constant 0 : index
    %c128_32 = arith.constant 128 : index
    %54 = vector.load %arg9[%c1_30, %c0_31, %c128_32] : memref<3x8x512xf32, #tpu.memory_space<vmem>>, vector<1x8x256xf32>
    %55 = vector.shape_cast %54 : vector<1x8x256xf32> to vector<8x256xf32>
    %56 = vector.shape_cast %48 : vector<8x256xf32> to vector<1x8x256xf32>
    tpu.vector_store %arg9[%c1_30, %c0_31, %c128_32], %56 {strides = array<i32>} : memref<3x8x512xf32, #tpu.memory_space<vmem>>, vector<1x8x256xf32>,
    %57 = vector.broadcast %22 : vector<1x256xf32> to vector<8x256xf32>
    %58 = arith.mulf %48, %57 : vector<8x256xf32>
    %c2_33 = arith.constant 2 : index
    %c0_34 = arith.constant 0 : index
    %c128_35 = arith.constant 128 : index
    %59 = vector.load %arg9[%c2_33, %c0_34, %c128_35] : memref<3x8x512xf32, #tpu.memory_space<vmem>>, vector<1x8x256xf32>
    %60 = vector.shape_cast %59 : vector<1x8x256xf32> to vector<8x256xf32>
    %61 = vector.shape_cast %58 : vector<8x256xf32> to vector<1x8x256xf32>
    tpu.vector_store %arg9[%c2_33, %c0_34, %c128_35], %61 {strides = array<i32>} : memref<3x8x512xf32, #tpu.memory_space<vmem>>, vector<1x8x256xf32>,
    %cst_36 = arith.constant 0.000000e+00 : f32
    %62 = vector.broadcast %cst_36 : f32 to vector<8x256xf32>
    %c0_37 = arith.constant 0 : index
    %c0_38 = arith.constant 0 : index
    %c111 = arith.constant 111 : index
    %63 = vector.load %arg9[%c0_37, %c0_38, %c111] : memref<3x8x512xf32, #tpu.memory_space<vmem>>, vector<1x8x256xf32>
    %64 = vector.shape_cast %63 : vector<1x8x256xf32> to vector<8x256xf32>
    %c0_39 = arith.constant 0 : index
    %c0_40 = arith.constant 0 : index
    %c0_41 = arith.constant 0 : index
    %65 = vector.load %arg2[%c0_39, %c0_40, %c0_41] : memref<9x8x8xf32, #tpu.memory_space<vmem>>, vector<1x8x8xf32>
    %66 = vector.shape_cast %65 : vector<1x8x8xf32> to vector<8x8xf32>
    %cst_42 = arith.constant dense<0.000000e+00> : vector<8x256xf32>
    %67 = tpu.matmul %66, %64, %cst_42 {dimension_numbers = #tpu.dot_dimension_numbers<[1], [0], [0], [1], [0, 0, 1, 1], [], []>} : vector<8x8xf32>, vector<8x256xf32>, vector<8x256xf32> -> vector<8x256xf32>
    %68 = arith.addf %62, %67 : vector<8x256xf32>
    %c1_43 = arith.constant 1 : index
    %c0_44 = arith.constant 0 : index
    %c112 = arith.constant 112 : index
    %69 = vector.load %arg9[%c1_43, %c0_44, %c112] : memref<3x8x512xf32, #tpu.memory_space<vmem>>, vector<1x8x256xf32>
    %70 = vector.shape_cast %69 : vector<1x8x256xf32> to vector<8x256xf32>
    %c1_45 = arith.constant 1 : index
    %c0_46 = arith.constant 0 : index
    %c0_47 = arith.constant 0 : index
    %71 = vector.load %arg2[%c1_45, %c0_46, %c0_47] : memref<9x8x8xf32, #tpu.memory_space<vmem>>, vector<1x8x8xf32>
    %72 = vector.shape_cast %71 : vector<1x8x8xf32> to vector<8x8xf32>
    %cst_48 = arith.constant dense<0.000000e+00> : vector<8x256xf32>
    %73 = tpu.matmul %72, %70, %cst_48 {dimension_numbers = #tpu.dot_dimension_numbers<[1], [0], [0], [1], [0, 0, 1, 1], [], []>} : vector<8x8xf32>, vector<8x256xf32>, vector<8x256xf32> -> vector<8x256xf32>
    %74 = arith.addf %68, %73 : vector<8x256xf32>
    %c2_49 = arith.constant 2 : index
    %c0_50 = arith.constant 0 : index
    %c113 = arith.constant 113 : index
    %75 = vector.load %arg9[%c2_49, %c0_50, %c113] : memref<3x8x512xf32, #tpu.memory_space<vmem>>, vector<1x8x256xf32>
    %76 = vector.shape_cast %75 : vector<1x8x256xf32> to vector<8x256xf32>
    %c2_51 = arith.constant 2 : index
    %c0_52 = arith.constant 0 : index
    %c0_53 = arith.constant 0 : index
    %77 = vector.load %arg2[%c2_51, %c0_52, %c0_53] : memref<9x8x8xf32, #tpu.memory_space<vmem>>, vector<1x8x8xf32>
    %78 = vector.shape_cast %77 : vector<1x8x8xf32> to vector<8x8xf32>
    %cst_54 = arith.constant dense<0.000000e+00> : vector<8x256xf32>
    %79 = tpu.matmul %78, %76, %cst_54 {dimension_numbers = #tpu.dot_dimension_numbers<[1], [0], [0], [1], [0, 0, 1, 1], [], []>} : vector<8x8xf32>, vector<8x256xf32>, vector<8x256xf32> -> vector<8x256xf32>
    %80 = arith.addf %74, %79 : vector<8x256xf32>
    %c0_55 = arith.constant 0 : index
    %c0_56 = arith.constant 0 : index
    %c127 = arith.constant 127 : index
    %81 = vector.load %arg9[%c0_55, %c0_56, %c127] : memref<3x8x512xf32, #tpu.memory_space<vmem>>, vector<1x8x256xf32>
    %82 = vector.shape_cast %81 : vector<1x8x256xf32> to vector<8x256xf32>
    %c3 = arith.constant 3 : index
    %c0_57 = arith.constant 0 : index
    %c0_58 = arith.constant 0 : index
    %83 = vector.load %arg2[%c3, %c0_57, %c0_58] : memref<9x8x8xf32, #tpu.memory_space<vmem>>, vector<1x8x8xf32>
    %84 = vector.shape_cast %83 : vector<1x8x8xf32> to vector<8x8xf32>
    %cst_59 = arith.constant dense<0.000000e+00> : vector<8x256xf32>
    %85 = tpu.matmul %84, %82, %cst_59 {dimension_numbers = #tpu.dot_dimension_numbers<[1], [0], [0], [1], [0, 0, 1, 1], [], []>} : vector<8x8xf32>, vector<8x256xf32>, vector<8x256xf32> -> vector<8x256xf32>
    %86 = arith.addf %80, %85 : vector<8x256xf32>
    %c1_60 = arith.constant 1 : index
    %c0_61 = arith.constant 0 : index
    %c128_62 = arith.constant 128 : index
    %87 = vector.load %arg9[%c1_60, %c0_61, %c128_62] : memref<3x8x512xf32, #tpu.memory_space<vmem>>, vector<1x8x256xf32>
    %88 = vector.shape_cast %87 : vector<1x8x256xf32> to vector<8x256xf32>
    %c4 = arith.constant 4 : index
    %c0_63 = arith.constant 0 : index
    %c0_64 = arith.constant 0 : index
    %89 = vector.load %arg2[%c4, %c0_63, %c0_64] : memref<9x8x8xf32, #tpu.memory_space<vmem>>, vector<1x8x8xf32>
    %90 = vector.shape_cast %89 : vector<1x8x8xf32> to vector<8x8xf32>
    %cst_65 = arith.constant dense<0.000000e+00> : vector<8x256xf32>
    %91 = tpu.matmul %90, %88, %cst_65 {dimension_numbers = #tpu.dot_dimension_numbers<[1], [0], [0], [1], [0, 0, 1, 1], [], []>} : vector<8x8xf32>, vector<8x256xf32>, vector<8x256xf32> -> vector<8x256xf32>
    %92 = arith.addf %86, %91 : vector<8x256xf32>
    %c2_66 = arith.constant 2 : index
    %c0_67 = arith.constant 0 : index
    %c129 = arith.constant 129 : index
    %93 = vector.load %arg9[%c2_66, %c0_67, %c129] : memref<3x8x512xf32, #tpu.memory_space<vmem>>, vector<1x8x256xf32>
    %94 = vector.shape_cast %93 : vector<1x8x256xf32> to vector<8x256xf32>
    %c5 = arith.constant 5 : index
    %c0_68 = arith.constant 0 : index
    %c0_69 = arith.constant 0 : index
    %95 = vector.load %arg2[%c5, %c0_68, %c0_69] : memref<9x8x8xf32, #tpu.memory_space<vmem>>, vector<1x8x8xf32>
    %96 = vector.shape_cast %95 : vector<1x8x8xf32> to vector<8x8xf32>
    %cst_70 = arith.constant dense<0.000000e+00> : vector<8x256xf32>
    %97 = tpu.matmul %96, %94, %cst_70 {dimension_numbers = #tpu.dot_dimension_numbers<[1], [0], [0], [1], [0, 0, 1, 1], [], []>} : vector<8x8xf32>, vector<8x256xf32>, vector<8x256xf32> -> vector<8x256xf32>
    %98 = arith.addf %92, %97 : vector<8x256xf32>
    %c0_71 = arith.constant 0 : index
    %c0_72 = arith.constant 0 : index
    %c143 = arith.constant 143 : index
    %99 = vector.load %arg9[%c0_71, %c0_72, %c143] : memref<3x8x512xf32, #tpu.memory_space<vmem>>, vector<1x8x256xf32>
    %100 = vector.shape_cast %99 : vector<1x8x256xf32> to vector<8x256xf32>
    %c6 = arith.constant 6 : index
    %c0_73 = arith.constant 0 : index
    %c0_74 = arith.constant 0 : index
    %101 = vector.load %arg2[%c6, %c0_73, %c0_74] : memref<9x8x8xf32, #tpu.memory_space<vmem>>, vector<1x8x8xf32>
    %102 = vector.shape_cast %101 : vector<1x8x8xf32> to vector<8x8xf32>
    %cst_75 = arith.constant dense<0.000000e+00> : vector<8x256xf32>
    %103 = tpu.matmul %102, %100, %cst_75 {dimension_numbers = #tpu.dot_dimension_numbers<[1], [0], [0], [1], [0, 0, 1, 1], [], []>} : vector<8x8xf32>, vector<8x256xf32>, vector<8x256xf32> -> vector<8x256xf32>
    %104 = arith.addf %98, %103 : vector<8x256xf32>
    %c1_76 = arith.constant 1 : index
    %c0_77 = arith.constant 0 : index
    %c144 = arith.constant 144 : index
    %105 = vector.load %arg9[%c1_76, %c0_77, %c144] : memref<3x8x512xf32, #tpu.memory_space<vmem>>, vector<1x8x256xf32>
    %106 = vector.shape_cast %105 : vector<1x8x256xf32> to vector<8x256xf32>
    %c7 = arith.constant 7 : index
    %c0_78 = arith.constant 0 : index
    %c0_79 = arith.constant 0 : index
    %107 = vector.load %arg2[%c7, %c0_78, %c0_79] : memref<9x8x8xf32, #tpu.memory_space<vmem>>, vector<1x8x8xf32>
    %108 = vector.shape_cast %107 : vector<1x8x8xf32> to vector<8x8xf32>
    %cst_80 = arith.constant dense<0.000000e+00> : vector<8x256xf32>
    %109 = tpu.matmul %108, %106, %cst_80 {dimension_numbers = #tpu.dot_dimension_numbers<[1], [0], [0], [1], [0, 0, 1, 1], [], []>} : vector<8x8xf32>, vector<8x256xf32>, vector<8x256xf32> -> vector<8x256xf32>
    %110 = arith.addf %104, %109 : vector<8x256xf32>
    %c2_81 = arith.constant 2 : index
    %c0_82 = arith.constant 0 : index
    %c145 = arith.constant 145 : index
    %111 = vector.load %arg9[%c2_81, %c0_82, %c145] : memref<3x8x512xf32, #tpu.memory_space<vmem>>, vector<1x8x256xf32>
    %112 = vector.shape_cast %111 : vector<1x8x256xf32> to vector<8x256xf32>
    %c8 = arith.constant 8 : index
    %c0_83 = arith.constant 0 : index
    %c0_84 = arith.constant 0 : index
    %113 = vector.load %arg2[%c8, %c0_83, %c0_84] : memref<9x8x8xf32, #tpu.memory_space<vmem>>, vector<1x8x8xf32>
    %114 = vector.shape_cast %113 : vector<1x8x8xf32> to vector<8x8xf32>
    %cst_85 = arith.constant dense<0.000000e+00> : vector<8x256xf32>
    %115 = tpu.matmul %114, %112, %cst_85 {dimension_numbers = #tpu.dot_dimension_numbers<[1], [0], [0], [1], [0, 0, 1, 1], [], []>} : vector<8x8xf32>, vector<8x256xf32>, vector<8x256xf32> -> vector<8x256xf32>
    %116 = arith.addf %110, %115 : vector<8x256xf32>
    %c0_86 = arith.constant 0 : index
    %c0_87 = arith.constant 0 : index
    %117 = vector.load %arg3[%c0_86, %c0_87] : memref<8x1xf32, #tpu.memory_space<vmem>>, vector<8x1xf32>
    %118 = vector.broadcast %117 : vector<8x1xf32> to vector<8x256xf32>
    %119 = arith.mulf %116, %118 : vector<8x256xf32>
    %c0_88 = arith.constant 0 : index
    %c0_89 = arith.constant 0 : index
    %120 = vector.load %arg4[%c0_88, %c0_89] : memref<8x1xf32, #tpu.memory_space<vmem>>, vector<8x1xf32>
    %121 = vector.broadcast %120 : vector<8x1xf32> to vector<8x256xf32>
    %122 = arith.addf %119, %121 : vector<8x256xf32>
    %cst_90 = arith.constant 0.000000e+00 : f32
    %123 = vector.broadcast %cst_90 : f32 to vector<8x256xf32>
    %124 = arith.maximumf %122, %123 : vector<8x256xf32>
    %125 = vector.broadcast %12 : vector<1x256xf32> to vector<8x256xf32>
    %126 = arith.mulf %124, %125 : vector<8x256xf32>
    %c0_91 = arith.constant 0 : index
    %c0_92 = arith.constant 0 : index
    %c128_93 = arith.constant 128 : index
    %127 = vector.load %arg9[%c0_91, %c0_92, %c128_93] : memref<3x8x512xf32, #tpu.memory_space<vmem>>, vector<1x8x256xf32>
    %128 = vector.shape_cast %127 : vector<1x8x256xf32> to vector<8x256xf32>
    %129 = vector.shape_cast %126 : vector<8x256xf32> to vector<1x8x256xf32>
    tpu.vector_store %arg9[%c0_91, %c0_92, %c128_93], %129 {strides = array<i32>} : memref<3x8x512xf32, #tpu.memory_space<vmem>>, vector<1x8x256xf32>,
    %c1_94 = arith.constant 1 : index
    %c0_95 = arith.constant 0 : index
    %c128_96 = arith.constant 128 : index
    %130 = vector.load %arg9[%c1_94, %c0_95, %c128_96] : memref<3x8x512xf32, #tpu.memory_space<vmem>>, vector<1x8x256xf32>
    %131 = vector.shape_cast %130 : vector<1x8x256xf32> to vector<8x256xf32>
    %132 = vector.shape_cast %124 : vector<8x256xf32> to vector<1x8x256xf32>
    tpu.vector_store %arg9[%c1_94, %c0_95, %c128_96], %132 {strides = array<i32>} : memref<3x8x512xf32, #tpu.memory_space<vmem>>, vector<1x8x256xf32>,
    %133 = vector.broadcast %22 : vector<1x256xf32> to vector<8x256xf32>
    %134 = arith.mulf %124, %133 : vector<8x256xf32>
    %c2_97 = arith.constant 2 : index
    %c0_98 = arith.constant 0 : index
    %c128_99 = arith.constant 128 : index
    %135 = vector.load %arg9[%c2_97, %c0_98, %c128_99] : memref<3x8x512xf32, #tpu.memory_space<vmem>>, vector<1x8x256xf32>
    %136 = vector.shape_cast %135 : vector<1x8x256xf32> to vector<8x256xf32>
    %137 = vector.shape_cast %134 : vector<8x256xf32> to vector<1x8x256xf32>
    tpu.vector_store %arg9[%c2_97, %c0_98, %c128_99], %137 {strides = array<i32>} : memref<3x8x512xf32, #tpu.memory_space<vmem>>, vector<1x8x256xf32>,
    %cst_100 = arith.constant 0.000000e+00 : f32
    %138 = vector.broadcast %cst_100 : f32 to vector<8x256xf32>
    %c0_101 = arith.constant 0 : index
    %c0_102 = arith.constant 0 : index
    %c111_103 = arith.constant 111 : index
    %139 = vector.load %arg9[%c0_101, %c0_102, %c111_103] : memref<3x8x512xf32, #tpu.memory_space<vmem>>, vector<1x8x256xf32>
    %140 = vector.shape_cast %139 : vector<1x8x256xf32> to vector<8x256xf32>
    %c0_104 = arith.constant 0 : index
    %c0_105 = arith.constant 0 : index
    %c0_106 = arith.constant 0 : index
    %141 = vector.load %arg5[%c0_104, %c0_105, %c0_106] : memref<9x8x8xf32, #tpu.memory_space<vmem>>, vector<1x8x8xf32>
    %142 = vector.shape_cast %141 : vector<1x8x8xf32> to vector<8x8xf32>
    %cst_107 = arith.constant dense<0.000000e+00> : vector<8x256xf32>
    %143 = tpu.matmul %142, %140, %cst_107 {dimension_numbers = #tpu.dot_dimension_numbers<[1], [0], [0], [1], [0, 0, 1, 1], [], []>} : vector<8x8xf32>, vector<8x256xf32>, vector<8x256xf32> -> vector<8x256xf32>
    %144 = arith.addf %138, %143 : vector<8x256xf32>
    %c1_108 = arith.constant 1 : index
    %c0_109 = arith.constant 0 : index
    %c112_110 = arith.constant 112 : index
    %145 = vector.load %arg9[%c1_108, %c0_109, %c112_110] : memref<3x8x512xf32, #tpu.memory_space<vmem>>, vector<1x8x256xf32>
    %146 = vector.shape_cast %145 : vector<1x8x256xf32> to vector<8x256xf32>
    %c1_111 = arith.constant 1 : index
    %c0_112 = arith.constant 0 : index
    %c0_113 = arith.constant 0 : index
    %147 = vector.load %arg5[%c1_111, %c0_112, %c0_113] : memref<9x8x8xf32, #tpu.memory_space<vmem>>, vector<1x8x8xf32>
    %148 = vector.shape_cast %147 : vector<1x8x8xf32> to vector<8x8xf32>
    %cst_114 = arith.constant dense<0.000000e+00> : vector<8x256xf32>
    %149 = tpu.matmul %148, %146, %cst_114 {dimension_numbers = #tpu.dot_dimension_numbers<[1], [0], [0], [1], [0, 0, 1, 1], [], []>} : vector<8x8xf32>, vector<8x256xf32>, vector<8x256xf32> -> vector<8x256xf32>
    %150 = arith.addf %144, %149 : vector<8x256xf32>
    %c2_115 = arith.constant 2 : index
    %c0_116 = arith.constant 0 : index
    %c113_117 = arith.constant 113 : index
    %151 = vector.load %arg9[%c2_115, %c0_116, %c113_117] : memref<3x8x512xf32, #tpu.memory_space<vmem>>, vector<1x8x256xf32>
    %152 = vector.shape_cast %151 : vector<1x8x256xf32> to vector<8x256xf32>
    %c2_118 = arith.constant 2 : index
    %c0_119 = arith.constant 0 : index
    %c0_120 = arith.constant 0 : index
    %153 = vector.load %arg5[%c2_118, %c0_119, %c0_120] : memref<9x8x8xf32, #tpu.memory_space<vmem>>, vector<1x8x8xf32>
    %154 = vector.shape_cast %153 : vector<1x8x8xf32> to vector<8x8xf32>
    %cst_121 = arith.constant dense<0.000000e+00> : vector<8x256xf32>
    %155 = tpu.matmul %154, %152, %cst_121 {dimension_numbers = #tpu.dot_dimension_numbers<[1], [0], [0], [1], [0, 0, 1, 1], [], []>} : vector<8x8xf32>, vector<8x256xf32>, vector<8x256xf32> -> vector<8x256xf32>
    %156 = arith.addf %150, %155 : vector<8x256xf32>
    %c0_122 = arith.constant 0 : index
    %c0_123 = arith.constant 0 : index
    %c127_124 = arith.constant 127 : index
    %157 = vector.load %arg9[%c0_122, %c0_123, %c127_124] : memref<3x8x512xf32, #tpu.memory_space<vmem>>, vector<1x8x256xf32>
    %158 = vector.shape_cast %157 : vector<1x8x256xf32> to vector<8x256xf32>
    %c3_125 = arith.constant 3 : index
    %c0_126 = arith.constant 0 : index
    %c0_127 = arith.constant 0 : index
    %159 = vector.load %arg5[%c3_125, %c0_126, %c0_127] : memref<9x8x8xf32, #tpu.memory_space<vmem>>, vector<1x8x8xf32>
    %160 = vector.shape_cast %159 : vector<1x8x8xf32> to vector<8x8xf32>
    %cst_128 = arith.constant dense<0.000000e+00> : vector<8x256xf32>
    %161 = tpu.matmul %160, %158, %cst_128 {dimension_numbers = #tpu.dot_dimension_numbers<[1], [0], [0], [1], [0, 0, 1, 1], [], []>} : vector<8x8xf32>, vector<8x256xf32>, vector<8x256xf32> -> vector<8x256xf32>
    %162 = arith.addf %156, %161 : vector<8x256xf32>
    %c1_129 = arith.constant 1 : index
    %c0_130 = arith.constant 0 : index
    %c128_131 = arith.constant 128 : index
    %163 = vector.load %arg9[%c1_129, %c0_130, %c128_131] : memref<3x8x512xf32, #tpu.memory_space<vmem>>, vector<1x8x256xf32>
    %164 = vector.shape_cast %163 : vector<1x8x256xf32> to vector<8x256xf32>
    %c4_132 = arith.constant 4 : index
    %c0_133 = arith.constant 0 : index
    %c0_134 = arith.constant 0 : index
    %165 = vector.load %arg5[%c4_132, %c0_133, %c0_134] : memref<9x8x8xf32, #tpu.memory_space<vmem>>, vector<1x8x8xf32>
    %166 = vector.shape_cast %165 : vector<1x8x8xf32> to vector<8x8xf32>
    %cst_135 = arith.constant dense<0.000000e+00> : vector<8x256xf32>
    %167 = tpu.matmul %166, %164, %cst_135 {dimension_numbers = #tpu.dot_dimension_numbers<[1], [0], [0], [1], [0, 0, 1, 1], [], []>} : vector<8x8xf32>, vector<8x256xf32>, vector<8x256xf32> -> vector<8x256xf32>
    %168 = arith.addf %162, %167 : vector<8x256xf32>
    %c2_136 = arith.constant 2 : index
    %c0_137 = arith.constant 0 : index
    %c129_138 = arith.constant 129 : index
    %169 = vector.load %arg9[%c2_136, %c0_137, %c129_138] : memref<3x8x512xf32, #tpu.memory_space<vmem>>, vector<1x8x256xf32>
    %170 = vector.shape_cast %169 : vector<1x8x256xf32> to vector<8x256xf32>
    %c5_139 = arith.constant 5 : index
    %c0_140 = arith.constant 0 : index
    %c0_141 = arith.constant 0 : index
    %171 = vector.load %arg5[%c5_139, %c0_140, %c0_141] : memref<9x8x8xf32, #tpu.memory_space<vmem>>, vector<1x8x8xf32>
    %172 = vector.shape_cast %171 : vector<1x8x8xf32> to vector<8x8xf32>
    %cst_142 = arith.constant dense<0.000000e+00> : vector<8x256xf32>
    %173 = tpu.matmul %172, %170, %cst_142 {dimension_numbers = #tpu.dot_dimension_numbers<[1], [0], [0], [1], [0, 0, 1, 1], [], []>} : vector<8x8xf32>, vector<8x256xf32>, vector<8x256xf32> -> vector<8x256xf32>
    %174 = arith.addf %168, %173 : vector<8x256xf32>
    %c0_143 = arith.constant 0 : index
    %c0_144 = arith.constant 0 : index
    %c143_145 = arith.constant 143 : index
    %175 = vector.load %arg9[%c0_143, %c0_144, %c143_145] : memref<3x8x512xf32, #tpu.memory_space<vmem>>, vector<1x8x256xf32>
    %176 = vector.shape_cast %175 : vector<1x8x256xf32> to vector<8x256xf32>
    %c6_146 = arith.constant 6 : index
    %c0_147 = arith.constant 0 : index
    %c0_148 = arith.constant 0 : index
    %177 = vector.load %arg5[%c6_146, %c0_147, %c0_148] : memref<9x8x8xf32, #tpu.memory_space<vmem>>, vector<1x8x8xf32>
    %178 = vector.shape_cast %177 : vector<1x8x8xf32> to vector<8x8xf32>
    %cst_149 = arith.constant dense<0.000000e+00> : vector<8x256xf32>
    %179 = tpu.matmul %178, %176, %cst_149 {dimension_numbers = #tpu.dot_dimension_numbers<[1], [0], [0], [1], [0, 0, 1, 1], [], []>} : vector<8x8xf32>, vector<8x256xf32>, vector<8x256xf32> -> vector<8x256xf32>
    %180 = arith.addf %174, %179 : vector<8x256xf32>
    %c1_150 = arith.constant 1 : index
    %c0_151 = arith.constant 0 : index
    %c144_152 = arith.constant 144 : index
    %181 = vector.load %arg9[%c1_150, %c0_151, %c144_152] : memref<3x8x512xf32, #tpu.memory_space<vmem>>, vector<1x8x256xf32>
    %182 = vector.shape_cast %181 : vector<1x8x256xf32> to vector<8x256xf32>
    %c7_153 = arith.constant 7 : index
    %c0_154 = arith.constant 0 : index
    %c0_155 = arith.constant 0 : index
    %183 = vector.load %arg5[%c7_153, %c0_154, %c0_155] : memref<9x8x8xf32, #tpu.memory_space<vmem>>, vector<1x8x8xf32>
    %184 = vector.shape_cast %183 : vector<1x8x8xf32> to vector<8x8xf32>
    %cst_156 = arith.constant dense<0.000000e+00> : vector<8x256xf32>
    %185 = tpu.matmul %184, %182, %cst_156 {dimension_numbers = #tpu.dot_dimension_numbers<[1], [0], [0], [1], [0, 0, 1, 1], [], []>} : vector<8x8xf32>, vector<8x256xf32>, vector<8x256xf32> -> vector<8x256xf32>
    %186 = arith.addf %180, %185 : vector<8x256xf32>
    %c2_157 = arith.constant 2 : index
    %c0_158 = arith.constant 0 : index
    %c145_159 = arith.constant 145 : index
    %187 = vector.load %arg9[%c2_157, %c0_158, %c145_159] : memref<3x8x512xf32, #tpu.memory_space<vmem>>, vector<1x8x256xf32>
    %188 = vector.shape_cast %187 : vector<1x8x256xf32> to vector<8x256xf32>
    %c8_160 = arith.constant 8 : index
    %c0_161 = arith.constant 0 : index
    %c0_162 = arith.constant 0 : index
    %189 = vector.load %arg5[%c8_160, %c0_161, %c0_162] : memref<9x8x8xf32, #tpu.memory_space<vmem>>, vector<1x8x8xf32>
    %190 = vector.shape_cast %189 : vector<1x8x8xf32> to vector<8x8xf32>
    %cst_163 = arith.constant dense<0.000000e+00> : vector<8x256xf32>
    %191 = tpu.matmul %190, %188, %cst_163 {dimension_numbers = #tpu.dot_dimension_numbers<[1], [0], [0], [1], [0, 0, 1, 1], [], []>} : vector<8x8xf32>, vector<8x256xf32>, vector<8x256xf32> -> vector<8x256xf32>
    %192 = arith.addf %186, %191 : vector<8x256xf32>
    %c0_164 = arith.constant 0 : index
    %c0_165 = arith.constant 0 : index
    %193 = vector.load %arg6[%c0_164, %c0_165] : memref<8x1xf32, #tpu.memory_space<vmem>>, vector<8x1xf32>
    %194 = vector.broadcast %193 : vector<8x1xf32> to vector<8x256xf32>
    %195 = arith.mulf %192, %194 : vector<8x256xf32>
    %c0_166 = arith.constant 0 : index
    %c0_167 = arith.constant 0 : index
    %196 = vector.load %arg7[%c0_166, %c0_167] : memref<8x1xf32, #tpu.memory_space<vmem>>, vector<8x1xf32>
    %197 = vector.broadcast %196 : vector<8x1xf32> to vector<8x256xf32>
    %198 = arith.addf %195, %197 : vector<8x256xf32>
    %cst_168 = arith.constant 0.000000e+00 : f32
    %199 = vector.broadcast %cst_168 : f32 to vector<8x256xf32>
    %200 = arith.maximumf %198, %199 : vector<8x256xf32>
    %c0_169 = arith.constant 0 : index
    %c0_170 = arith.constant 0 : index
    %c0_171 = arith.constant 0 : index
    %201 = vector.load %arg8[%c0_169, %c0_170, %c0_171] : memref<1x8x256xf32, #tpu.memory_space<vmem>>, vector<1x8x256xf32>
    %202 = vector.shape_cast %201 : vector<1x8x256xf32> to vector<8x256xf32>
    %203 = vector.shape_cast %200 : vector<8x256xf32> to vector<1x8x256xf32>
    tpu.vector_store %arg8[%c0_169, %c0_170, %c0_171], %203 {strides = array<i32>} : memref<1x8x256xf32, #tpu.memory_space<vmem>>, vector<1x8x256xf32>,
    return
  }
  func.func @transform_0(%arg0: i32) -> (i32, i32, i32) {
    %c0_i32 = arith.constant 0 : i32
    %c0_i32_0 = arith.constant 0 : i32
    %c0_i32_1 = arith.constant 0 : i32
    return %arg0, %c0_i32, %c0_i32_0 : i32, i32, i32
  }
  func.func @transform_1(%arg0: i32) -> (i32, i32, i32) {
    %c0_i32 = arith.constant 0 : i32
    %c0_i32_0 = arith.constant 0 : i32
    %c0_i32_1 = arith.constant 0 : i32
    %c0_i32_2 = arith.constant 0 : i32
    return %c0_i32, %c0_i32_0, %c0_i32_1 : i32, i32, i32
  }
  func.func @transform_2(%arg0: i32) -> (i32, i32) {
    %c0_i32 = arith.constant 0 : i32
    %c0_i32_0 = arith.constant 0 : i32
    %c0_i32_1 = arith.constant 0 : i32
    return %c0_i32, %c0_i32_0 : i32, i32
  }
  func.func @transform_3(%arg0: i32) -> (i32, i32) {
    %c0_i32 = arith.constant 0 : i32
    %c0_i32_0 = arith.constant 0 : i32
    %c0_i32_1 = arith.constant 0 : i32
    return %c0_i32, %c0_i32_0 : i32, i32
  }
  func.func @transform_4(%arg0: i32) -> (i32, i32, i32) {
    %c0_i32 = arith.constant 0 : i32
    %c0_i32_0 = arith.constant 0 : i32
    %c0_i32_1 = arith.constant 0 : i32
    %c0_i32_2 = arith.constant 0 : i32
    return %c0_i32, %c0_i32_0, %c0_i32_1 : i32, i32, i32
  }
  func.func @transform_5(%arg0: i32) -> (i32, i32) {
    %c0_i32 = arith.constant 0 : i32
    %c0_i32_0 = arith.constant 0 : i32
    %c0_i32_1 = arith.constant 0 : i32
    return %c0_i32, %c0_i32_0 : i32, i32
  }
  func.func @transform_6(%arg0: i32) -> (i32, i32) {
    %c0_i32 = arith.constant 0 : i32
    %c0_i32_0 = arith.constant 0 : i32
    %c0_i32_1 = arith.constant 0 : i32
    return %c0_i32, %c0_i32_0 : i32, i32
  }
  func.func @transform_7(%arg0: i32) -> (i32, i32, i32) {
    %c0_i32 = arith.constant 0 : i32
    %c0_i32_0 = arith.constant 0 : i32
    %c0_i32_1 = arith.constant 0 : i32
    return %arg0, %c0_i32, %c0_i32_0 : i32, i32, i32
  }
}

</mosaic_0001>

<llo_original>
// kernel: residual_block_apply.1
$region0: #{residual_block_apply.1}
  #allocation0 [shape = 'u32[]', space=smem, size = 0x4, offset = 0x4, fixed_abs, tag = 'smem constant byte address 0x4 - core index']
  #allocation1 [shape = 'u32[72,128]{1,0:T(1,128)}', space=vmem, size = 0x9000, scoped, tag = 'internal scratch']
  #allocation2 [shape = 'f32[3,8,512]{2,1,0:T(8,128)}', space=vmem, size = 0xc000, scoped, tag = 'scratch operand']
  %s0 = inlined_call_operand.vmem [shape: f32[2,8,256], index: 0, kind: input, shape index: {}]
  %s1 = inlined_call_operand.vmem [shape: f32[9,8,8], index: 1, kind: input, shape index: {}]
  %s2 = inlined_call_operand.vmem [shape: f32[8,1], index: 2, kind: input, shape index: {}]
  %s3 = inlined_call_operand.vmem [shape: f32[8,1], index: 3, kind: input, shape index: {}]
  %s4 = inlined_call_operand.vmem [shape: f32[9,8,8], index: 4, kind: input, shape index: {}]
  %s5 = inlined_call_operand.vmem [shape: f32[8,1], index: 5, kind: input, shape index: {}]
  %s6 = inlined_call_operand.vmem [shape: f32[8,1], index: 6, kind: input, shape index: {}]
  %s7 = inlined_call_operand.vmem [shape: f32[2,8,256], index: 7, kind: output, shape index: {}]
  %s8 = sld [smem:[#allocation0]]
  $region61: #{residual_block_apply.1} parent=0
    _
  %s10 = ssub.s32 1, %s8
  %s11 = scalar_select 0, %s10, %s8
  loop: start=0, step=1, limit=4
  $region2: #{residual_block_apply.1} parent=0 // loop_pre_header
    _
  $region3: #{residual_block_apply.1} parent=0 // loop_header
    %s13 = sphi 0, %s17
    %p14 = scmp.ge.s32.totalorder %s13, 4
    %s23 = sphi 0, %s25
    %s26 = sphi 0, %s23
    %s27 = sphi 0, %s26
    %s43 = sphi 0, %s27
    %s47 = sphi 0, %s47
    %s49 = sphi 0, %s47
    %s50 = sphi 0, %s49
    %s64 = sphi 0, %s50
    %s68 = sphi 0, %s68
    %s70 = sphi 0, %s68
    %s71 = sphi 0, %s70
    %s85 = sphi 0, %s71
    %s89 = sphi 0, %s89
    %s91 = sphi 0, %s89
    %s92 = sphi 0, %s91
    %s106 = sphi 0, %s92
    %s110 = sphi 0, %s110
    %s112 = sphi 0, %s110
    %s113 = sphi 0, %s112
    %s127 = sphi 0, %s113
    %s131 = sphi 0, %s131
    %s133 = sphi 0, %s131
    %s134 = sphi 0, %s133
    %s148 = sphi 0, %s134
    %s152 = sphi 0, %s152
    %s154 = sphi 0, %s152
    %s155 = sphi 0, %s154
    %s169 = sphi 0, %s155
    %s175 = sphi 0, %s177
    %s178 = sphi 0, %s175
    %s179 = sphi 0, %s178
    %s195 = sphi 0, %s179
  $region4: #{residual_block_apply.1} parent=0 // loop_header_branch
    %16 = sbr.rel (%p14) target = $region8
  $region5: #{residual_block_apply.1} parent=0 // loop_body
    %s18 = ssub.s32 %s13, 1
    %s19 = ssub.s32 %s13, 2
    %s20 = sadd.s32 %s13, 1
    %s21 = ssub.s32 %s13, %s20
    %p22 = scmp.eq.s32.totalorder %s21, 0
    %s24 = sadd.s32 %s23, 1
    %s25 = scalar_select %p22, %s23, %s24
    %p28 = pneg %p22
    %p29 = scmp.eq.s32.totalorder %s13, 1
    %p30 = por %p28, %p29
    %p31 = scmp.ne.s32.totalorder %s23, %s26
    %p32 = scmp.eq.s32.totalorder %s13, 0
    %p33 = por %p31, %p32
    %p34 = scmp.ne.s32.totalorder %s23, %s26
    %p35 = scmp.eq.s32.totalorder %s18, 1
    %p36 = por %p34, %p35
    %p37 = scmp.ne.s32.totalorder %s26, %s27
    %p38 = scmp.eq.s32.totalorder %s18, 0
    %p39 = por %p37, %p38
    %p40 = scmp.ne.s32.totalorder %s26, %s27
    %p41 = scmp.eq.s32.totalorder %s19, 1
    %p42 = por %p40, %p41
    %p44 = scmp.ne.s32.totalorder %s27, %s43
    %p45 = scmp.eq.s32.totalorder %s19, 0
    %p46 = por %p44, %p45
    %s48 = sadd.s32 %s47, 1
    %p51 = scmp.eq.s32.totalorder %s13, 1
    %p52 = scmp.ne.s32.totalorder %s47, %s49
    %p53 = scmp.eq.s32.totalorder %s13, 0
    %p54 = por %p52, %p53
    %p55 = scmp.ne.s32.totalorder %s47, %s49
    %p56 = scmp.eq.s32.totalorder %s18, 1
    %p57 = por %p55, %p56
    %p58 = scmp.ne.s32.totalorder %s49, %s50
    %p59 = scmp.eq.s32.totalorder %s18, 0
    %p60 = por %p58, %p59
    %p61 = scmp.ne.s32.totalorder %s49, %s50
    %p62 = scmp.eq.s32.totalorder %s19, 1
    %p63 = por %p61, %p62
    %p65 = scmp.ne.s32.totalorder %s50, %s64
    %p66 = scmp.eq.s32.totalorder %s19, 0
    %p67 = por %p65, %p66
    %s69 = sadd.s32 %s68, 1
    %p72 = scmp.eq.s32.totalorder %s13, 1
    %p73 = scmp.ne.s32.totalorder %s68, %s70
    %p74 = scmp.eq.s32.totalorder %s13, 0
    %p75 = por %p73, %p74
    %p76 = scmp.ne.s32.totalorder %s68, %s70
    %p77 = scmp.eq.s32.totalorder %s18, 1
    %p78 = por %p76, %p77
    %p79 = scmp.ne.s32.totalorder %s70, %s71
    %p80 = scmp.eq.s32.totalorder %s18, 0
    %p81 = por %p79, %p80
    %p82 = scmp.ne.s32.totalorder %s70, %s71
    %p83 = scmp.eq.s32.totalorder %s19, 1
    %p84 = por %p82, %p83
    %p86 = scmp.ne.s32.totalorder %s71, %s85
    %p87 = scmp.eq.s32.totalorder %s19, 0
    %p88 = por %p86, %p87
    %s90 = sadd.s32 %s89, 1
    %p93 = scmp.eq.s32.totalorder %s13, 1
    %p94 = scmp.ne.s32.totalorder %s89, %s91
    %p95 = scmp.eq.s32.totalorder %s13, 0
    %p96 = por %p94, %p95
    %p97 = scmp.ne.s32.totalorder %s89, %s91
    %p98 = scmp.eq.s32.totalorder %s18, 1
    %p99 = por %p97, %p98
    %p100 = scmp.ne.s32.totalorder %s91, %s92
    %p101 = scmp.eq.s32.totalorder %s18, 0
    %p102 = por %p100, %p101
    %p103 = scmp.ne.s32.totalorder %s91, %s92
    %p104 = scmp.eq.s32.totalorder %s19, 1
    %p105 = por %p103, %p104
    %p107 = scmp.ne.s32.totalorder %s92, %s106
    %p108 = scmp.eq.s32.totalorder %s19, 0
    %p109 = por %p107, %p108
    %s111 = sadd.s32 %s110, 1
    %p114 = scmp.eq.s32.totalorder %s13, 1
    %p115 = scmp.ne.s32.totalorder %s110, %s112
    %p116 = scmp.eq.s32.totalorder %s13, 0
    %p117 = por %p115, %p116
    %p118 = scmp.ne.s32.totalorder %s110, %s112
    %p119 = scmp.eq.s32.totalorder %s18, 1
    %p120 = por %p118, %p119
    %p121 = scmp.ne.s32.totalorder %s112, %s113
    %p122 = scmp.eq.s32.totalorder %s18, 0
    %p123 = por %p121, %p122
    %p124 = scmp.ne.s32.totalorder %s112, %s113
    %p125 = scmp.eq.s32.totalorder %s19, 1
    %p126 = por %p124, %p125
    %p128 = scmp.ne.s32.totalorder %s113, %s127
    %p129 = scmp.eq.s32.totalorder %s19, 0
    %p130 = por %p128, %p129
    %s132 = sadd.s32 %s131, 1
    %p135 = scmp.eq.s32.totalorder %s13, 1
    %p136 = scmp.ne.s32.totalorder %s131, %s133
    %p137 = scmp.eq.s32.totalorder %s13, 0
    %p138 = por %p136, %p137
    %p139 = scmp.ne.s32.totalorder %s131, %s133
    %p140 = scmp.eq.s32.totalorder %s18, 1
    %p141 = por %p139, %p140
    %p142 = scmp.ne.s32.totalorder %s133, %s134
    %p143 = scmp.eq.s32.totalorder %s18, 0
    %p144 = por %p142, %p143
    %p145 = scmp.ne.s32.totalorder %s133, %s134
    %p146 = scmp.eq.s32.totalorder %s19, 1
    %p147 = por %p145, %p146
    %p149 = scmp.ne.s32.totalorder %s134, %s148
    %p150 = scmp.eq.s32.totalorder %s19, 0
    %p151 = por %p149, %p150
    %s153 = sadd.s32 %s152, 1
    %p156 = scmp.eq.s32.totalorder %s13, 1
    %p157 = scmp.ne.s32.totalorder %s152, %s154
    %p158 = scmp.eq.s32.totalorder %s13, 0
    %p159 = por %p157, %p158
    %p160 = scmp.ne.s32.totalorder %s152, %s154
    %p161 = scmp.eq.s32.totalorder %s18, 1
    %p162 = por %p160, %p161
    %p163 = scmp.ne.s32.totalorder %s154, %s155
    %p164 = scmp.eq.s32.totalorder %s18, 0
    %p165 = por %p163, %p164
    %p166 = scmp.ne.s32.totalorder %s154, %s155
    %p167 = scmp.eq.s32.totalorder %s19, 1
    %p168 = por %p166, %p167
    %p170 = scmp.ne.s32.totalorder %s155, %s169
    %p171 = scmp.eq.s32.totalorder %s19, 0
    %p172 = por %p170, %p171
    %s173 = ssub.s32 %s13, %s20
    %p174 = scmp.eq.s32.totalorder %s173, 0
    %s176 = sadd.s32 %s175, 1
    %s177 = scalar_select %p174, %s175, %s176
    %p180 = pneg %p174
    %p181 = scmp.eq.s32.totalorder %s13, 1
    %p182 = por %p180, %p181
    %p183 = scmp.ne.s32.totalorder %s175, %s178
    %p184 = scmp.eq.s32.totalorder %s13, 0
    %p185 = por %p183, %p184
    %p186 = scmp.ne.s32.totalorder %s175, %s178
    %p187 = scmp.eq.s32.totalorder %s18, 1
    %p188 = por %p186, %p187
    %p189 = scmp.ne.s32.totalorder %s178, %s179
    %p190 = scmp.eq.s32.totalorder %s18, 0
    %p191 = por %p189, %p190
    %p192 = scmp.ne.s32.totalorder %s178, %s179
    %p193 = scmp.eq.s32.totalorder %s19, 1
    %p194 = por %p192, %p193
    %p196 = scmp.ne.s32.totalorder %s179, %s195
    %p197 = scmp.eq.s32.totalorder %s19, 0
    %p198 = por %p196, %p197
    %p199 = scmp.le.s32.totalorder 1, %s13
    %p200 = scmp.lt.s32.totalorder %s13, 3
    %p201 = pnand %p199, %p200
    %p202 = pneg %p201
    // Predicated region
    $region9: #{residual_block_apply.1} parent=5 // pred_check
      _
    $region10: #{residual_block_apply.1} parent=5 // pred_check_branch
      %204 = sbr.rel (%p201) target = $region12
    $region11: #{residual_block_apply.1} parent=5 // pred_region
      %s205 = ssub.s32 %s13, 1
      // Predicated region
      $region13: #{residual_block_apply.1} parent=11 // pred_check
        %p206 = pneg %p60
      $region14: #{residual_block_apply.1} parent=11 // pred_check_branch
        %208 = sbr.rel (%p206) target = $region16
      $region15: #{residual_block_apply.1} parent=11 // pred_region
        _
      $region16: #{residual_block_apply.1} parent=11 // pred_fallthru
        _
      // Predicated region
      $region17: #{residual_block_apply.1} parent=11 // pred_check
        %p209 = pneg %p81
      $region18: #{residual_block_apply.1} parent=11 // pred_check_branch
        %211 = sbr.rel (%p209) target = $region20
      $region19: #{residual_block_apply.1} parent=11 // pred_region
        _
      $region20: #{residual_block_apply.1} parent=11 // pred_fallthru
        _
      // Predicated region
      $region21: #{residual_block_apply.1} parent=11 // pred_check
        %p212 = pneg %p102
      $region22: #{residual_block_apply.1} parent=11 // pred_check_branch
        %214 = sbr.rel (%p212) target = $region24
      $region23: #{residual_block_apply.1} parent=11 // pred_region
        _
      $region24: #{residual_block_apply.1} parent=11 // pred_fallthru
        _
      // Predicated region
      $region25: #{residual_block_apply.1} parent=11 // pred_check
        %p215 = pneg %p123
      $region26: #{residual_block_apply.1} parent=11 // pred_check_branch
        %217 = sbr.rel (%p215) target = $region28
      $region27: #{residual_block_apply.1} parent=11 // pred_region
        _
      $region28: #{residual_block_apply.1} parent=11 // pred_fallthru
        _
      // Predicated region
      $region29: #{residual_block_apply.1} parent=11 // pred_check
        %p218 = pneg %p144
      $region30: #{residual_block_apply.1} parent=11 // pred_check_branch
        %220 = sbr.rel (%p218) target = $region32
      $region31: #{residual_block_apply.1} parent=11 // pred_region
        _
      $region32: #{residual_block_apply.1} parent=11 // pred_fallthru
        _
      // Predicated region
      $region33: #{residual_block_apply.1} parent=11 // pred_check
        %p221 = pneg %p165
      $region34: #{residual_block_apply.1} parent=11 // pred_check_branch
        %223 = sbr.rel (%p221) target = $region36
      $region35: #{residual_block_apply.1} parent=11 // pred_region
        _
      $region36: #{residual_block_apply.1} parent=11 // pred_fallthru
        _
    $region12: #{residual_block_apply.1} parent=5 // pred_fallthru
      _
    %p224 = scmp.lt.s32.totalorder %s13, 2
    // Predicated region
    $region37: #{residual_block_apply.1} parent=5 // pred_check
      %p225 = pneg %p224
    $region38: #{residual_block_apply.1} parent=5 // pred_check_branch
      %227 = sbr.rel (%p225) target = $region40
    $region39: #{residual_block_apply.1} parent=5 // pred_region
      // Predicated region
      $region41: #{residual_block_apply.1} parent=39 // pred_check
        %p228 = pneg %p33
      $region42: #{residual_block_apply.1} parent=39 // pred_check_branch
        %230 = sbr.rel (%p228) target = $region44
      $region43: #{residual_block_apply.1} parent=39 // pred_region
        %p231 = scmp.lt.s32.totalorder %s13, 1
        %s232 = scalar_select %p231, %s13, 1
        %s233 = smul.addr %s232, 2
        %s234 = smul.addr %s233, 8
        %s235 = scalar_lea.vmem %s0, %s234
      $region44: #{residual_block_apply.1} parent=39 // pred_fallthru
        _
    $region40: #{residual_block_apply.1} parent=5 // pred_fallthru
      _
    %p236 = scmp.le.s32.totalorder 1, %s13
    %p237 = scmp.lt.s32.totalorder %s13, 3
    %p238 = pnand %p236, %p237
    %p239 = pneg %p238
    // Predicated region
    $region45: #{residual_block_apply.1} parent=5 // pred_check
      _
    $region46: #{residual_block_apply.1} parent=5 // pred_check_branch
      %241 = sbr.rel (%p238) target = $region48
    $region47: #{residual_block_apply.1} parent=5 // pred_region
      %s242 = ssub.s32 %s13, 1
      %p243 = scmp.lt.s32.totalorder %s18, 1
      %s244 = scalar_select %p243, %s18, 1
      %s245 = smul.addr %s244, 2
      %s246 = smul.addr %s245, 8
      %s247 = scalar_lea.vmem %s0, %s246
      %p248 = pneg %p39
      %p249 = pneg %p36
      %p250 = pneg %p60
      %p251 = pneg %p57
      %p252 = pneg %p81
      %p253 = pneg %p78
      %p254 = pneg %p102
      %p255 = pneg %p99
      %p256 = pneg %p123
      %p257 = pneg %p120
      %p258 = pneg %p144
      %p259 = pneg %p141
      %p260 = pneg %p165
      %p261 = pneg %p162
      %p262 = pneg %p191
      %p263 = pneg %p188
      %p264 = scmp.lt.s32.totalorder %s18, 1
      %s265 = scalar_select %p264, %s18, 1
      %s266 = smul.addr %s265, 2
      %s267 = smul.addr %s266, 8
      %s268 = scalar_lea.vmem %s7, %s267
      %p269 = scmp.lt.s32.totalorder %s18, 1
      %s270 = scalar_select %p269, %s18, 1
      %s271 = smul.addr %s270, 2
      %s272 = smul.addr %s271, 8
      %s273 = scalar_lea.vmem %s0, %s272
      %p274 = scmp.lt.s32.totalorder %s18, 1
      %s275 = scalar_select %p274, %s18, 1
      %s276 = smul.addr %s275, 2
      %s277 = smul.addr %s276, 8
      %s278 = scalar_lea.vmem %s7, %s277
      %v279 = vlaneseq
      %v280 = vand.u32 %v279, 127
      %v281 = vadd.s32 %v280, 128
      %v282 = vand.u32 %v280, 15
      %v283 = vand.u32 %v281, 15
      %v284 = vsub.s32 %v282, 4294967295
      %v285 = vsub.s32 %v283, 4294967295
      %vm286 = vcmp.ge.s32.totalorder %v284, 0
      %vm287 = vcmp.ge.s32.totalorder %v285, 0
      %vm288 = vcmp.lt.s32.totalorder %v284, 16
      %vm289 = vcmp.lt.s32.totalorder %v285, 16
      %vm290 = vmand %vm286, %vm288
      %vm291 = vmand %vm287, %vm289
      %v292 = vsel %vm290, 1.0, 0.0
      %v293 = vsel %vm291, 1.0, 0.0
      %v294 = vsub.s32 %v282, 1
      %v295 = vsub.s32 %v283, 1
      %vm296 = vcmp.ge.s32.totalorder %v294, 0
      %vm297 = vcmp.ge.s32.totalorder %v295, 0
      %vm298 = vcmp.lt.s32.totalorder %v294, 16
      %vm299 = vcmp.lt.s32.totalorder %v295, 16
      %vm300 = vmand %vm296, %vm298
      %vm301 = vmand %vm297, %vm299
      %v302 = vsel %vm300, 1.0, 0.0
      %v303 = vsel %vm301, 1.0, 0.0
      %304 = vst [vmem:[#allocation2] sm:$0xff] 0.0
      %305 = vst [vmem:[#allocation2 + $0x18] sm:$0xff] 0.0
      %s306 = scalar_lea.vmem [#allocation2], 32
      %307 = vst [vmem:[%s306] sm:$0xff] 0.0
      %308 = vst [vmem:[%s306 + $0x18] sm:$0xff] 0.0
      %s309 = scalar_lea.vmem [#allocation2], 64
      %310 = vst [vmem:[%s309] sm:$0xff] 0.0
      %311 = vst [vmem:[%s309 + $0x18] sm:$0xff] 0.0
      %v312 = vld [vmem:[%s273] sm:$0xff]
      %v313 = vld [vmem:[%s273 + $0x8] sm:$0xff]
      %v314 = vmul.f32 %v312, %v292
      %v315 = vmul.f32 %v313, %v293
      %316 = vst [vmem:[#allocation2 + $0x8] sm:$0xff] %v314
      %317 = vst [vmem:[#allocation2 + $0x10] sm:$0xff] %v315
      %318 = vst [vmem:[%s306 + $0x8] sm:$0xff] %v312
      %319 = vst [vmem:[%s306 + $0x10] sm:$0xff] %v313
      %v320 = vmul.f32 %v312, %v302
      %v321 = vmul.f32 %v313, %v303
      %322 = vst [vmem:[%s309 + $0x8] sm:$0xff] %v320
      %323 = vst [vmem:[%s309 + $0x10] sm:$0xff] %v321
      %v324 = vld [vmem:[#allocation2] sm:$0xff]
      %v325 = vld [vmem:[#allocation2 + $0x8] sm:$0xff]
      %v326 = vld [vmem:[#allocation2 + $0x10] sm:$0xff]
      %v327 = vld [vmem:[%s1] sm:$0xff]
      %v328 = vld [vmem:[%s306] sm:$0xff]
      %v329 = vld [vmem:[%s306 + $0x8] sm:$0xff]
      %v330 = vld [vmem:[%s306 + $0x10] sm:$0xff]
      %s331 = scalar_lea.vmem %s1, 8
      %v332 = vld [vmem:[%s331] sm:$0xff]
      %336 = vrot.lane.b32.xlu0 %v328, 16
      %v337 = vpop.permute.xlu0 %336
      %338 = vrot.lane.b32.xlu0 %v329, 16
      %v339 = vpop.permute.xlu0 %338
      %340 = vrot.lane.b32.xlu0 %v330, 16
      %v341 = vpop.permute.xlu0 %340
      %vm342 = vcmask 130048
      %v343 = vsel %vm342, %v337, %v339
      %v344 = vsel %vm342, %v339, %v341
      %vm347 = vcmask 64512
      %v349 = vsel %vm347, %v332, 0
      %351 = vmatpush.msra.mxu0 0.0
      %352 = vmatpush.msra.mxu0 0.0
      %353 = vmatpush.msra.mxu0 0.0
      %354 = vmatpush.msra.mxu0 0.0
      %355 = vmatpush.msra.mxu0 0.0
      %356 = vmatpush.msra.mxu0 0.0
      %357 = vmatpush.msra.mxu0 0.0
      %358 = vmatpush.msra.mxu0 0.0
      %359 = vmatpush.msra.mxu0 0.0
      %360 = vmatpush.msra.mxu0 0.0
      %361 = vmatpush.msra.mxu0 0.0
      %362 = vmatpush.msra.mxu0 0.0
      %363 = vmatpush.msra.mxu0 0.0
      %364 = vmatpush.msra.mxu0 0.0
      %365 = vmatpush.msra.mxu0 0.0
      %366 = vmatpush.msra.mxu0 %v343
      %367 = vmatmul.f32.gmra.mxu0 %v349
      %v368 = vpop.f32.mrf.mxu0
      %v369 = vadd.f32 0.0, %v368
      %370 = vdwg.mxu0
      %371 = vmatpush.msra.mxu0 0.0
      %372 = vmatpush.msra.mxu0 0.0
      %373 = vmatpush.msra.mxu0 0.0
      %374 = vmatpush.msra.mxu0 0.0
      %375 = vmatpush.msra.mxu0 0.0
      %376 = vmatpush.msra.mxu0 0.0
      %377 = vmatpush.msra.mxu0 0.0
      %378 = vmatpush.msra.mxu0 0.0
      %379 = vmatpush.msra.mxu0 0.0
      %380 = vmatpush.msra.mxu0 0.0
      %381 = vmatpush.msra.mxu0 0.0
      %382 = vmatpush.msra.mxu0 0.0
      %383 = vmatpush.msra.mxu0 0.0
      %384 = vmatpush.msra.mxu0 0.0
      %385 = vmatpush.msra.mxu0 0.0
      %386 = vmatpush.msra.mxu0 %v344
      %387 = vmatmul.f32.gmra.mxu0 %v349
      %v388 = vpop.f32.mrf.mxu0
      %v389 = vadd.f32 0.0, %v388
      %390 = vdwg.mxu0
      %394 = vrot.lane.b32.xlu0 %v324, 17
      %v395 = vpop.permute.xlu0 %394
      %396 = vrot.lane.b32.xlu0 %v325, 17
      %v397 = vpop.permute.xlu0 %396
      %398 = vrot.lane.b32.xlu0 %v326, 17
      %v399 = vpop.permute.xlu0 %398
      %vm400 = vcmask 138240
      %v401 = vsel %vm400, %v395, %v397
      %v402 = vsel %vm400, %v397, %v399
      %v406 = vsel %vm347, %v327, 0
      %408 = vmatpush.msra.mxu0 0.0
      %409 = vmatpush.msra.mxu0 0.0
      %410 = vmatpush.msra.mxu0 0.0
      %411 = vmatpush.msra.mxu0 0.0
      %412 = vmatpush.msra.mxu0 0.0
      %413 = vmatpush.msra.mxu0 0.0
      %414 = vmatpush.msra.mxu0 0.0
      %415 = vmatpush.msra.mxu0 0.0
      %416 = vmatpush.msra.mxu0 0.0
      %417 = vmatpush.msra.mxu0 0.0
      %418 = vmatpush.msra.mxu0 0.0
      %419 = vmatpush.msra.mxu0 0.0
      %420 = vmatpush.msra.mxu0 0.0
      %421 = vmatpush.msra.mxu0 0.0
      %422 = vmatpush.msra.mxu0 0.0
      %423 = vmatpush.msra.mxu0 %v401
      %424 = vmatmul.f32.gmra.mxu0 %v406
      %v425 = vpop.f32.mrf.mxu0
      %v426 = vadd.f32 %v369, %v425
      %427 = vdwg.mxu0
      %428 = vmatpush.msra.mxu0 0.0
      %429 = vmatpush.msra.mxu0 0.0
      %430 = vmatpush.msra.mxu0 0.0
      %431 = vmatpush.msra.mxu0 0.0
      %432 = vmatpush.msra.mxu0 0.0
      %433 = vmatpush.msra.mxu0 0.0
      %434 = vmatpush.msra.mxu0 0.0
      %435 = vmatpush.msra.mxu0 0.0
      %436 = vmatpush.msra.mxu0 0.0
      %437 = vmatpush.msra.mxu0 0.0
      %438 = vmatpush.msra.mxu0 0.0
      %439 = vmatpush.msra.mxu0 0.0
      %440 = vmatpush.msra.mxu0 0.0
      %441 = vmatpush.msra.mxu0 0.0
      %442 = vmatpush.msra.mxu0 0.0
      %443 = vmatpush.msra.mxu0 %v402
      %444 = vmatmul.f32.gmra.mxu0 %v406
      %v445 = vpop.f32.mrf.mxu0
      %v446 = vadd.f32 %v389, %v445
      %447 = vdwg.mxu0
      %v448 = vld [vmem:[%s309] sm:$0xff]
      %v449 = vld [vmem:[%s309 + $0x8] sm:$0xff]
      %v450 = vld [vmem:[%s309 + $0x10] sm:$0xff]
      %s451 = scalar_lea.vmem %s1, 16
      %v452 = vld [vmem:[%s451] sm:$0xff]
      %456 = vrot.lane.b32.xlu0 %v448, 15
      %v457 = vpop.permute.xlu0 %456
      %458 = vrot.lane.b32.xlu0 %v449, 15
      %v459 = vpop.permute.xlu0 %458
      %460 = vrot.lane.b32.xlu0 %v450, 15
      %v461 = vpop.permute.xlu0 %460
      %vm462 = vcmask 121856
      %v463 = vsel %vm462, %v457, %v459
      %v464 = vsel %vm462, %v459, %v461
      %v468 = vsel %vm347, %v452, 0
      %470 = vmatpush.msra.mxu0 0.0
      %471 = vmatpush.msra.mxu0 0.0
      %472 = vmatpush.msra.mxu0 0.0
      %473 = vmatpush.msra.mxu0 0.0
      %474 = vmatpush.msra.mxu0 0.0
      %475 = vmatpush.msra.mxu0 0.0
      %476 = vmatpush.msra.mxu0 0.0
      %477 = vmatpush.msra.mxu0 0.0
      %478 = vmatpush.msra.mxu0 0.0
      %479 = vmatpush.msra.mxu0 0.0
      %480 = vmatpush.msra.mxu0 0.0
      %481 = vmatpush.msra.mxu0 0.0
      %482 = vmatpush.msra.mxu0 0.0
      %483 = vmatpush.msra.mxu0 0.0
      %484 = vmatpush.msra.mxu0 0.0
      %485 = vmatpush.msra.mxu0 %v463
      %486 = vmatmul.f32.gmra.mxu0 %v468
      %v487 = vpop.f32.mrf.mxu0
      %v488 = vadd.f32 0.0, %v487
      %489 = vdwg.mxu0
      %490 = vmatpush.msra.mxu0 0.0
      %491 = vmatpush.msra.mxu0 0.0
      %492 = vmatpush.msra.mxu0 0.0
      %493 = vmatpush.msra.mxu0 0.0
      %494 = vmatpush.msra.mxu0 0.0
      %495 = vmatpush.msra.mxu0 0.0
      %496 = vmatpush.msra.mxu0 0.0
      %497 = vmatpush.msra.mxu0 0.0
      %498 = vmatpush.msra.mxu0 0.0
      %499 = vmatpush.msra.mxu0 0.0
      %500 = vmatpush.msra.mxu0 0.0
      %501 = vmatpush.msra.mxu0 0.0
      %502 = vmatpush.msra.mxu0 0.0
      %503 = vmatpush.msra.mxu0 0.0
      %504 = vmatpush.msra.mxu0 0.0
      %505 = vmatpush.msra.mxu0 %v464
      %506 = vmatmul.f32.gmra.mxu0 %v468
      %v507 = vpop.f32.mrf.mxu0
      %v508 = vadd.f32 0.0, %v507
      %509 = vdwg.mxu0
      %v510 = vadd.f32 %v426, %v488
      %v511 = vadd.f32 %v446, %v508
      %s512 = scalar_lea.vmem %s1, 24
      %v513 = vld [vmem:[%s512] sm:$0xff]
      %514 = vrot.lane.b32.xlu0 %v324, 1
      %v515 = vpop.permute.xlu0 %514
      %516 = vrot.lane.b32.xlu0 %v325, 1
      %v517 = vpop.permute.xlu0 %516
      %518 = vrot.lane.b32.xlu0 %v326, 1
      %v519 = vpop.permute.xlu0 %518
      %vm520 = vcmask 7168
      %v521 = vsel %vm520, %v515, %v517
      %v522 = vsel %vm520, %v517, %v519
      %v526 = vsel %vm347, %v513, 0
      %528 = vmatpush.msra.mxu0 0.0
      %529 = vmatpush.msra.mxu0 0.0
      %530 = vmatpush.msra.mxu0 0.0
      %531 = vmatpush.msra.mxu0 0.0
      %532 = vmatpush.msra.mxu0 0.0
      %533 = vmatpush.msra.mxu0 0.0
      %534 = vmatpush.msra.mxu0 0.0
      %535 = vmatpush.msra.mxu0 0.0
      %536 = vmatpush.msra.mxu0 0.0
      %537 = vmatpush.msra.mxu0 0.0
      %538 = vmatpush.msra.mxu0 0.0
      %539 = vmatpush.msra.mxu0 0.0
      %540 = vmatpush.msra.mxu0 0.0
      %541 = vmatpush.msra.mxu0 0.0
      %542 = vmatpush.msra.mxu0 0.0
      %543 = vmatpush.msra.mxu0 %v521
      %544 = vmatmul.f32.gmra.mxu0 %v526
      %v545 = vpop.f32.mrf.mxu0
      %v546 = vadd.f32 0.0, %v545
      %547 = vdwg.mxu0
      %548 = vmatpush.msra.mxu0 0.0
      %549 = vmatpush.msra.mxu0 0.0
      %550 = vmatpush.msra.mxu0 0.0
      %551 = vmatpush.msra.mxu0 0.0
      %552 = vmatpush.msra.mxu0 0.0
      %553 = vmatpush.msra.mxu0 0.0
      %554 = vmatpush.msra.mxu0 0.0
      %555 = vmatpush.msra.mxu0 0.0
      %556 = vmatpush.msra.mxu0 0.0
      %557 = vmatpush.msra.mxu0 0.0
      %558 = vmatpush.msra.mxu0 0.0
      %559 = vmatpush.msra.mxu0 0.0
      %560 = vmatpush.msra.mxu0 0.0
      %561 = vmatpush.msra.mxu0 0.0
      %562 = vmatpush.msra.mxu0 0.0
      %563 = vmatpush.msra.mxu0 %v522
      %564 = vmatmul.f32.gmra.mxu0 %v526
      %v565 = vpop.f32.mrf.mxu0
      %v566 = vadd.f32 0.0, %v565
      %567 = vdwg.mxu0
      %v568 = vadd.f32 %v510, %v546
      %v569 = vadd.f32 %v511, %v566
      %s570 = scalar_lea.vmem %s1, 32
      %v571 = vld [vmem:[%s570] sm:$0xff]
      %v573 = vsel %vm347, %v571, 0
      %575 = vmatpush.msra.mxu0 0.0
      %576 = vmatpush.msra.mxu0 0.0
      %577 = vmatpush.msra.mxu0 0.0
      %578 = vmatpush.msra.mxu0 0.0
      %579 = vmatpush.msra.mxu0 0.0
      %580 = vmatpush.msra.mxu0 0.0
      %581 = vmatpush.msra.mxu0 0.0
      %582 = vmatpush.msra.mxu0 0.0
      %583 = vmatpush.msra.mxu0 0.0
      %584 = vmatpush.msra.mxu0 0.0
      %585 = vmatpush.msra.mxu0 0.0
      %586 = vmatpush.msra.mxu0 0.0
      %587 = vmatpush.msra.mxu0 0.0
      %588 = vmatpush.msra.mxu0 0.0
      %589 = vmatpush.msra.mxu0 0.0
      %590 = vmatpush.msra.mxu0 %v329
      %591 = vmatmul.f32.gmra.mxu0 %v573
      %v592 = vpop.f32.mrf.mxu0
      %v593 = vadd.f32 0.0, %v592
      %594 = vdwg.mxu0
      %595 = vmatpush.msra.mxu0 0.0
      %596 = vmatpush.msra.mxu0 0.0
      %597 = vmatpush.msra.mxu0 0.0
      %598 = vmatpush.msra.mxu0 0.0
      %599 = vmatpush.msra.mxu0 0.0
      %600 = vmatpush.msra.mxu0 0.0
      %601 = vmatpush.msra.mxu0 0.0
      %602 = vmatpush.msra.mxu0 0.0
      %603 = vmatpush.msra.mxu0 0.0
      %604 = vmatpush.msra.mxu0 0.0
      %605 = vmatpush.msra.mxu0 0.0
      %606 = vmatpush.msra.mxu0 0.0
      %607 = vmatpush.msra.mxu0 0.0
      %608 = vmatpush.msra.mxu0 0.0
      %609 = vmatpush.msra.mxu0 0.0
      %610 = vmatpush.msra.mxu0 %v330
      %611 = vmatmul.f32.gmra.mxu0 %v573
      %v612 = vpop.f32.mrf.mxu0
      %v613 = vadd.f32 0.0, %v612
      %614 = vdwg.mxu0
      %v615 = vadd.f32 %v568, %v593
      %v616 = vadd.f32 %v569, %v613
      %v617 = vld [vmem:[%s309 + $0x8] sm:$0xff]
      %v618 = vld [vmem:[%s309 + $0x10] sm:$0xff]
      %v619 = vld [vmem:[%s309 + $0x18] sm:$0xff]
      %s620 = scalar_lea.vmem %s1, 40
      %v621 = vld [vmem:[%s620] sm:$0xff]
      %625 = vrot.lane.b32.xlu0 %v617, 127
      %v626 = vpop.permute.xlu0 %625
      %627 = vrot.lane.b32.xlu0 %v618, 127
      %v628 = vpop.permute.xlu0 %627
      %629 = vrot.lane.b32.xlu0 %v619, 127
      %v630 = vpop.permute.xlu0 %629
      %vm631 = vcmask 1039360
      %v632 = vsel %vm631, %v626, %v628
      %v633 = vsel %vm631, %v628, %v630
      %v637 = vsel %vm347, %v621, 0
      %639 = vmatpush.msra.mxu0 0.0
      %640 = vmatpush.msra.mxu0 0.0
      %641 = vmatpush.msra.mxu0 0.0
      %642 = vmatpush.msra.mxu0 0.0
      %643 = vmatpush.msra.mxu0 0.0
      %644 = vmatpush.msra.mxu0 0.0
      %645 = vmatpush.msra.mxu0 0.0
      %646 = vmatpush.msra.mxu0 0.0
      %647 = vmatpush.msra.mxu0 0.0
      %648 = vmatpush.msra.mxu0 0.0
      %649 = vmatpush.msra.mxu0 0.0
      %650 = vmatpush.msra.mxu0 0.0
      %651 = vmatpush.msra.mxu0 0.0
      %652 = vmatpush.msra.mxu0 0.0
      %653 = vmatpush.msra.mxu0 0.0
      %654 = vmatpush.msra.mxu0 %v632
      %655 = vmatmul.f32.gmra.mxu0 %v637
      %v656 = vpop.f32.mrf.mxu0
      %v657 = vadd.f32 0.0, %v656
      %658 = vdwg.mxu0
      %659 = vmatpush.msra.mxu0 0.0
      %660 = vmatpush.msra.mxu0 0.0
      %661 = vmatpush.msra.mxu0 0.0
      %662 = vmatpush.msra.mxu0 0.0
      %663 = vmatpush.msra.mxu0 0.0
      %664 = vmatpush.msra.mxu0 0.0
      %665 = vmatpush.msra.mxu0 0.0
      %666 = vmatpush.msra.mxu0 0.0
      %667 = vmatpush.msra.mxu0 0.0
      %668 = vmatpush.msra.mxu0 0.0
      %669 = vmatpush.msra.mxu0 0.0
      %670 = vmatpush.msra.mxu0 0.0
      %671 = vmatpush.msra.mxu0 0.0
      %672 = vmatpush.msra.mxu0 0.0
      %673 = vmatpush.msra.mxu0 0.0
      %674 = vmatpush.msra.mxu0 %v633
      %675 = vmatmul.f32.gmra.mxu0 %v637
      %v676 = vpop.f32.mrf.mxu0
      %v677 = vadd.f32 0.0, %v676
      %678 = vdwg.mxu0
      %v679 = vadd.f32 %v615, %v657
      %v680 = vadd.f32 %v616, %v677
      %v681 = vld [vmem:[#allocation2 + $0x8] sm:$0xff]
      %v682 = vld [vmem:[#allocation2 + $0x10] sm:$0xff]
      %v683 = vld [vmem:[#allocation2 + $0x18] sm:$0xff]
      %s684 = scalar_lea.vmem %s1, 48
      %v685 = vld [vmem:[%s684] sm:$0xff]
      %689 = vrot.lane.b32.xlu0 %v681, 113
      %v690 = vpop.permute.xlu0 %689
      %691 = vrot.lane.b32.xlu0 %v682, 113
      %v692 = vpop.permute.xlu0 %691
      %693 = vrot.lane.b32.xlu0 %v683, 113
      %v694 = vpop.permute.xlu0 %693
      %vm695 = vcmask 924672
      %v696 = vsel %vm695, %v690, %v692
      %v697 = vsel %vm695, %v692, %v694
      %v701 = vsel %vm347, %v685, 0
      %703 = vmatpush.msra.mxu0 0.0
      %704 = vmatpush.msra.mxu0 0.0
      %705 = vmatpush.msra.mxu0 0.0
      %706 = vmatpush.msra.mxu0 0.0
      %707 = vmatpush.msra.mxu0 0.0
      %708 = vmatpush.msra.mxu0 0.0
      %709 = vmatpush.msra.mxu0 0.0
      %710 = vmatpush.msra.mxu0 0.0
      %711 = vmatpush.msra.mxu0 0.0
      %712 = vmatpush.msra.mxu0 0.0
      %713 = vmatpush.msra.mxu0 0.0
      %714 = vmatpush.msra.mxu0 0.0
      %715 = vmatpush.msra.mxu0 0.0
      %716 = vmatpush.msra.mxu0 0.0
      %717 = vmatpush.msra.mxu0 0.0
      %718 = vmatpush.msra.mxu0 %v696
      %719 = vmatmul.f32.gmra.mxu0 %v701
      %v720 = vpop.f32.mrf.mxu0
      %v721 = vadd.f32 0.0, %v720
      %722 = vdwg.mxu0
      %723 = vmatpush.msra.mxu0 0.0
      %724 = vmatpush.msra.mxu0 0.0
      %725 = vmatpush.msra.mxu0 0.0
      %726 = vmatpush.msra.mxu0 0.0
      %727 = vmatpush.msra.mxu0 0.0
      %728 = vmatpush.msra.mxu0 0.0
      %729 = vmatpush.msra.mxu0 0.0
      %730 = vmatpush.msra.mxu0 0.0
      %731 = vmatpush.msra.mxu0 0.0
      %732 = vmatpush.msra.mxu0 0.0
      %733 = vmatpush.msra.mxu0 0.0
      %734 = vmatpush.msra.mxu0 0.0
      %735 = vmatpush.msra.mxu0 0.0
      %736 = vmatpush.msra.mxu0 0.0
      %737 = vmatpush.msra.mxu0 0.0
      %738 = vmatpush.msra.mxu0 %v697
      %739 = vmatmul.f32.gmra.mxu0 %v701
      %v740 = vpop.f32.mrf.mxu0
      %v741 = vadd.f32 0.0, %v740
      %742 = vdwg.mxu0
      %v743 = vadd.f32 %v679, %v721
      %v744 = vadd.f32 %v680, %v741
      %v745 = vld [vmem:[%s306 + $0x8] sm:$0xff]
      %v746 = vld [vmem:[%s306 + $0x10] sm:$0xff]
      %v747 = vld [vmem:[%s306 + $0x18] sm:$0xff]
      %s748 = scalar_lea.vmem %s1, 56
      %v749 = vld [vmem:[%s748] sm:$0xff]
      %753 = vrot.lane.b32.xlu0 %v745, 112
      %v754 = vpop.permute.xlu0 %753
      %755 = vrot.lane.b32.xlu0 %v746, 112
      %v756 = vpop.permute.xlu0 %755
      %757 = vrot.lane.b32.xlu0 %v747, 112
      %v758 = vpop.permute.xlu0 %757
      %vm759 = vcmask 916480
      %v760 = vsel %vm759, %v754, %v756
      %v761 = vsel %vm759, %v756, %v758
      %v765 = vsel %vm347, %v749, 0
      %767 = vmatpush.msra.mxu0 0.0
      %768 = vmatpush.msra.mxu0 0.0
      %769 = vmatpush.msra.mxu0 0.0
      %770 = vmatpush.msra.mxu0 0.0
      %771 = vmatpush.msra.mxu0 0.0
      %772 = vmatpush.msra.mxu0 0.0
      %773 = vmatpush.msra.mxu0 0.0
      %774 = vmatpush.msra.mxu0 0.0
      %775 = vmatpush.msra.mxu0 0.0
      %776 = vmatpush.msra.mxu0 0.0
      %777 = vmatpush.msra.mxu0 0.0
      %778 = vmatpush.msra.mxu0 0.0
      %779 = vmatpush.msra.mxu0 0.0
      %780 = vmatpush.msra.mxu0 0.0
      %781 = vmatpush.msra.mxu0 0.0
      %782 = vmatpush.msra.mxu0 %v760
      %783 = vmatmul.f32.gmra.mxu0 %v765
      %v784 = vpop.f32.mrf.mxu0
      %v785 = vadd.f32 0.0, %v784
      %786 = vdwg.mxu0
      %787 = vmatpush.msra.mxu0 0.0
      %788 = vmatpush.msra.mxu0 0.0
      %789 = vmatpush.msra.mxu0 0.0
      %790 = vmatpush.msra.mxu0 0.0
      %791 = vmatpush.msra.mxu0 0.0
      %792 = vmatpush.msra.mxu0 0.0
      %793 = vmatpush.msra.mxu0 0.0
      %794 = vmatpush.msra.mxu0 0.0
      %795 = vmatpush.msra.mxu0 0.0
      %796 = vmatpush.msra.mxu0 0.0
      %797 = vmatpush.msra.mxu0 0.0
      %798 = vmatpush.msra.mxu0 0.0
      %799 = vmatpush.msra.mxu0 0.0
      %800 = vmatpush.msra.mxu0 0.0
      %801 = vmatpush.msra.mxu0 0.0
      %802 = vmatpush.msra.mxu0 %v761
      %803 = vmatmul.f32.gmra.mxu0 %v765
      %v804 = vpop.f32.mrf.mxu0
      %v805 = vadd.f32 0.0, %v804
      %806 = vdwg.mxu0
      %v807 = vadd.f32 %v743, %v785
      %v808 = vadd.f32 %v744, %v805
      %s809 = scalar_lea.vmem %s1, 64
      %v810 = vld [vmem:[%s809] sm:$0xff]
      %811 = vrot.lane.b32.xlu0 %v617, 111
      %v812 = vpop.permute.xlu0 %811
      %813 = vrot.lane.b32.xlu0 %v618, 111
      %v814 = vpop.permute.xlu0 %813
      %815 = vrot.lane.b32.xlu0 %v619, 111
      %v816 = vpop.permute.xlu0 %815
      %vm817 = vcmask 908288
      %v818 = vsel %vm817, %v812, %v814
      %v819 = vsel %vm817, %v814, %v816
      %v823 = vsel %vm347, %v810, 0
      %825 = vmatpush.msra.mxu0 0.0
      %826 = vmatpush.msra.mxu0 0.0
      %827 = vmatpush.msra.mxu0 0.0
      %828 = vmatpush.msra.mxu0 0.0
      %829 = vmatpush.msra.mxu0 0.0
      %830 = vmatpush.msra.mxu0 0.0
      %831 = vmatpush.msra.mxu0 0.0
      %832 = vmatpush.msra.mxu0 0.0
      %833 = vmatpush.msra.mxu0 0.0
      %834 = vmatpush.msra.mxu0 0.0
      %835 = vmatpush.msra.mxu0 0.0
      %836 = vmatpush.msra.mxu0 0.0
      %837 = vmatpush.msra.mxu0 0.0
      %838 = vmatpush.msra.mxu0 0.0
      %839 = vmatpush.msra.mxu0 0.0
      %840 = vmatpush.msra.mxu0 %v818
      %841 = vmatmul.f32.gmra.mxu0 %v823
      %v842 = vpop.f32.mrf.mxu0
      %v843 = vadd.f32 0.0, %v842
      %844 = vdwg.mxu0
      %845 = vmatpush.msra.mxu0 0.0
      %846 = vmatpush.msra.mxu0 0.0
      %847 = vmatpush.msra.mxu0 0.0
      %848 = vmatpush.msra.mxu0 0.0
      %849 = vmatpush.msra.mxu0 0.0
      %850 = vmatpush.msra.mxu0 0.0
      %851 = vmatpush.msra.mxu0 0.0
      %852 = vmatpush.msra.mxu0 0.0
      %853 = vmatpush.msra.mxu0 0.0
      %854 = vmatpush.msra.mxu0 0.0
      %855 = vmatpush.msra.mxu0 0.0
      %856 = vmatpush.msra.mxu0 0.0
      %857 = vmatpush.msra.mxu0 0.0
      %858 = vmatpush.msra.mxu0 0.0
      %859 = vmatpush.msra.mxu0 0.0
      %860 = vmatpush.msra.mxu0 %v819
      %861 = vmatmul.f32.gmra.mxu0 %v823
      %v862 = vpop.f32.mrf.mxu0
      %v863 = vadd.f32 0.0, %v862
      %864 = vdwg.mxu0
      %v865 = vadd.f32 %v807, %v843
      %v866 = vadd.f32 %v808, %v863
      %v867 = vld [vmem:[%s2] sm:$0xff]
      %869 = vset.pattern.permute.xlu0 0
      %870 = vperm.xlu0 %869, %v867
      %v871 = vpop.permute.xlu0 %870
      %v873 = vmul.f32 %v865, %v871
      %v874 = vmul.f32 %v866, %v871
      %v875 = vld [vmem:[%s3] sm:$0xff]
      %877 = vset.pattern.permute.xlu0 0
      %878 = vperm.xlu0 %877, %v875
      %v879 = vpop.permute.xlu0 %878
      %v881 = vadd.f32 %v873, %v879
      %v882 = vadd.f32 %v874, %v879
      %v883 = vmax.f32 %v881, 0.0
      %v884 = vmax.f32 %v882, 0.0
      %v885 = vmul.f32 %v883, %v292
      %v886 = vmul.f32 %v884, %v293
      %887 = vst [vmem:[#allocation2 + $0x8] sm:$0xff] %v885
      %888 = vst [vmem:[#allocation2 + $0x10] sm:$0xff] %v886
      %889 = vst [vmem:[%s306 + $0x8] sm:$0xff] %v883
      %890 = vst [vmem:[%s306 + $0x10] sm:$0xff] %v884
      %v891 = vmul.f32 %v883, %v302
      %v892 = vmul.f32 %v884, %v303
      %893 = vst [vmem:[%s309 + $0x8] sm:$0xff] %v891
      %894 = vst [vmem:[%s309 + $0x10] sm:$0xff] %v892
      %v895 = vld [vmem:[#allocation2] sm:$0xff]
      %v896 = vld [vmem:[#allocation2 + $0x8] sm:$0xff]
      %v897 = vld [vmem:[#allocation2 + $0x10] sm:$0xff]
      %v898 = vld [vmem:[%s4] sm:$0xff]
      %v899 = vld [vmem:[%s306] sm:$0xff]
      %v900 = vld [vmem:[%s306 + $0x8] sm:$0xff]
      %v901 = vld [vmem:[%s306 + $0x10] sm:$0xff]
      %s902 = scalar_lea.vmem %s4, 8
      %v903 = vld [vmem:[%s902] sm:$0xff]
      %907 = vrot.lane.b32.xlu0 %v899, 16
      %v908 = vpop.permute.xlu0 %907
      %909 = vrot.lane.b32.xlu0 %v900, 16
      %v910 = vpop.permute.xlu0 %909
      %911 = vrot.lane.b32.xlu0 %v901, 16
      %v912 = vpop.permute.xlu0 %911
      %v913 = vsel %vm342, %v908, %v910
      %v914 = vsel %vm342, %v910, %v912
      %v918 = vsel %vm347, %v903, 0
      %920 = vmatpush.msra.mxu0 0.0
      %921 = vmatpush.msra.mxu0 0.0
      %922 = vmatpush.msra.mxu0 0.0
      %923 = vmatpush.msra.mxu0 0.0
      %924 = vmatpush.msra.mxu0 0.0
      %925 = vmatpush.msra.mxu0 0.0
      %926 = vmatpush.msra.mxu0 0.0
      %927 = vmatpush.msra.mxu0 0.0
      %928 = vmatpush.msra.mxu0 0.0
      %929 = vmatpush.msra.mxu0 0.0
      %930 = vmatpush.msra.mxu0 0.0
      %931 = vmatpush.msra.mxu0 0.0
      %932 = vmatpush.msra.mxu0 0.0
      %933 = vmatpush.msra.mxu0 0.0
      %934 = vmatpush.msra.mxu0 0.0
      %935 = vmatpush.msra.mxu0 %v913
      %936 = vmatmul.f32.gmra.mxu0 %v918
      %v937 = vpop.f32.mrf.mxu0
      %v938 = vadd.f32 0.0, %v937
      %939 = vdwg.mxu0
      %940 = vmatpush.msra.mxu0 0.0
      %941 = vmatpush.msra.mxu0 0.0
      %942 = vmatpush.msra.mxu0 0.0
      %943 = vmatpush.msra.mxu0 0.0
      %944 = vmatpush.msra.mxu0 0.0
      %945 = vmatpush.msra.mxu0 0.0
      %946 = vmatpush.msra.mxu0 0.0
      %947 = vmatpush.msra.mxu0 0.0
      %948 = vmatpush.msra.mxu0 0.0
      %949 = vmatpush.msra.mxu0 0.0
      %950 = vmatpush.msra.mxu0 0.0
      %951 = vmatpush.msra.mxu0 0.0
      %952 = vmatpush.msra.mxu0 0.0
      %953 = vmatpush.msra.mxu0 0.0
      %954 = vmatpush.msra.mxu0 0.0
      %955 = vmatpush.msra.mxu0 %v914
      %956 = vmatmul.f32.gmra.mxu0 %v918
      %v957 = vpop.f32.mrf.mxu0
      %v958 = vadd.f32 0.0, %v957
      %959 = vdwg.mxu0
      %963 = vrot.lane.b32.xlu0 %v895, 17
      %v964 = vpop.permute.xlu0 %963
      %965 = vrot.lane.b32.xlu0 %v896, 17
      %v966 = vpop.permute.xlu0 %965
      %967 = vrot.lane.b32.xlu0 %v897, 17
      %v968 = vpop.permute.xlu0 %967
      %v969 = vsel %vm400, %v964, %v966
      %v970 = vsel %vm400, %v966, %v968
      %v974 = vsel %vm347, %v898, 0
      %976 = vmatpush.msra.mxu0 0.0
      %977 = vmatpush.msra.mxu0 0.0
      %978 = vmatpush.msra.mxu0 0.0
      %979 = vmatpush.msra.mxu0 0.0
      %980 = vmatpush.msra.mxu0 0.0
      %981 = vmatpush.msra.mxu0 0.0
      %982 = vmatpush.msra.mxu0 0.0
      %983 = vmatpush.msra.mxu0 0.0
      %984 = vmatpush.msra.mxu0 0.0
      %985 = vmatpush.msra.mxu0 0.0
      %986 = vmatpush.msra.mxu0 0.0
      %987 = vmatpush.msra.mxu0 0.0
      %988 = vmatpush.msra.mxu0 0.0
      %989 = vmatpush.msra.mxu0 0.0
      %990 = vmatpush.msra.mxu0 0.0
      %991 = vmatpush.msra.mxu0 %v969
      %992 = vmatmul.f32.gmra.mxu0 %v974
      %v993 = vpop.f32.mrf.mxu0
      %v994 = vadd.f32 %v938, %v993
      %995 = vdwg.mxu0
      %996 = vmatpush.msra.mxu0 0.0
      %997 = vmatpush.msra.mxu0 0.0
      %998 = vmatpush.msra.mxu0 0.0
      %999 = vmatpush.msra.mxu0 0.0
      %1000 = vmatpush.msra.mxu0 0.0
      %1001 = vmatpush.msra.mxu0 0.0
      %1002 = vmatpush.msra.mxu0 0.0
      %1003 = vmatpush.msra.mxu0 0.0
      %1004 = vmatpush.msra.mxu0 0.0
      %1005 = vmatpush.msra.mxu0 0.0
      %1006 = vmatpush.msra.mxu0 0.0
      %1007 = vmatpush.msra.mxu0 0.0
      %1008 = vmatpush.msra.mxu0 0.0
      %1009 = vmatpush.msra.mxu0 0.0
      %1010 = vmatpush.msra.mxu0 0.0
      %1011 = vmatpush.msra.mxu0 %v970
      %1012 = vmatmul.f32.gmra.mxu0 %v974
      %v1013 = vpop.f32.mrf.mxu0
      %v1014 = vadd.f32 %v958, %v1013
      %1015 = vdwg.mxu0
      %v1016 = vld [vmem:[%s309] sm:$0xff]
      %v1017 = vld [vmem:[%s309 + $0x8] sm:$0xff]
      %v1018 = vld [vmem:[%s309 + $0x10] sm:$0xff]
      %s1019 = scalar_lea.vmem %s4, 16
      %v1020 = vld [vmem:[%s1019] sm:$0xff]
      %1024 = vrot.lane.b32.xlu0 %v1016, 15
      %v1025 = vpop.permute.xlu0 %1024
      %1026 = vrot.lane.b32.xlu0 %v1017, 15
      %v1027 = vpop.permute.xlu0 %1026
      %1028 = vrot.lane.b32.xlu0 %v1018, 15
      %v1029 = vpop.permute.xlu0 %1028
      %v1030 = vsel %vm462, %v1025, %v1027
      %v1031 = vsel %vm462, %v1027, %v1029
      %v1035 = vsel %vm347, %v1020, 0
      %1037 = vmatpush.msra.mxu0 0.0
      %1038 = vmatpush.msra.mxu0 0.0
      %1039 = vmatpush.msra.mxu0 0.0
      %1040 = vmatpush.msra.mxu0 0.0
      %1041 = vmatpush.msra.mxu0 0.0
      %1042 = vmatpush.msra.mxu0 0.0
      %1043 = vmatpush.msra.mxu0 0.0
      %1044 = vmatpush.msra.mxu0 0.0
      %1045 = vmatpush.msra.mxu0 0.0
      %1046 = vmatpush.msra.mxu0 0.0
      %1047 = vmatpush.msra.mxu0 0.0
      %1048 = vmatpush.msra.mxu0 0.0
      %1049 = vmatpush.msra.mxu0 0.0
      %1050 = vmatpush.msra.mxu0 0.0
      %1051 = vmatpush.msra.mxu0 0.0
      %1052 = vmatpush.msra.mxu0 %v1030
      %1053 = vmatmul.f32.gmra.mxu0 %v1035
      %v1054 = vpop.f32.mrf.mxu0
      %v1055 = vadd.f32 0.0, %v1054
      %1056 = vdwg.mxu0
      %1057 = vmatpush.msra.mxu0 0.0
      %1058 = vmatpush.msra.mxu0 0.0
      %1059 = vmatpush.msra.mxu0 0.0
      %1060 = vmatpush.msra.mxu0 0.0
      %1061 = vmatpush.msra.mxu0 0.0
      %1062 = vmatpush.msra.mxu0 0.0
      %1063 = vmatpush.msra.mxu0 0.0
      %1064 = vmatpush.msra.mxu0 0.0
      %1065 = vmatpush.msra.mxu0 0.0
      %1066 = vmatpush.msra.mxu0 0.0
      %1067 = vmatpush.msra.mxu0 0.0
      %1068 = vmatpush.msra.mxu0 0.0
      %1069 = vmatpush.msra.mxu0 0.0
      %1070 = vmatpush.msra.mxu0 0.0
      %1071 = vmatpush.msra.mxu0 0.0
      %1072 = vmatpush.msra.mxu0 %v1031
      %1073 = vmatmul.f32.gmra.mxu0 %v1035
      %v1074 = vpop.f32.mrf.mxu0
      %v1075 = vadd.f32 0.0, %v1074
      %1076 = vdwg.mxu0
      %v1077 = vadd.f32 %v994, %v1055
      %v1078 = vadd.f32 %v1014, %v1075
      %s1079 = scalar_lea.vmem %s4, 24
      %v1080 = vld [vmem:[%s1079] sm:$0xff]
      %1081 = vrot.lane.b32.xlu0 %v895, 1
      %v1082 = vpop.permute.xlu0 %1081
      %1083 = vrot.lane.b32.xlu0 %v896, 1
      %v1084 = vpop.permute.xlu0 %1083
      %1085 = vrot.lane.b32.xlu0 %v897, 1
      %v1086 = vpop.permute.xlu0 %1085
      %v1087 = vsel %vm520, %v1082, %v1084
      %v1088 = vsel %vm520, %v1084, %v1086
      %v1092 = vsel %vm347, %v1080, 0
      %1094 = vmatpush.msra.mxu0 0.0
      %1095 = vmatpush.msra.mxu0 0.0
      %1096 = vmatpush.msra.mxu0 0.0
      %1097 = vmatpush.msra.mxu0 0.0
      %1098 = vmatpush.msra.mxu0 0.0
      %1099 = vmatpush.msra.mxu0 0.0
      %1100 = vmatpush.msra.mxu0 0.0
      %1101 = vmatpush.msra.mxu0 0.0
      %1102 = vmatpush.msra.mxu0 0.0
      %1103 = vmatpush.msra.mxu0 0.0
      %1104 = vmatpush.msra.mxu0 0.0
      %1105 = vmatpush.msra.mxu0 0.0
      %1106 = vmatpush.msra.mxu0 0.0
      %1107 = vmatpush.msra.mxu0 0.0
      %1108 = vmatpush.msra.mxu0 0.0
      %1109 = vmatpush.msra.mxu0 %v1087
      %1110 = vmatmul.f32.gmra.mxu0 %v1092
      %v1111 = vpop.f32.mrf.mxu0
      %v1112 = vadd.f32 0.0, %v1111
      %1113 = vdwg.mxu0
      %1114 = vmatpush.msra.mxu0 0.0
      %1115 = vmatpush.msra.mxu0 0.0
      %1116 = vmatpush.msra.mxu0 0.0
      %1117 = vmatpush.msra.mxu0 0.0
      %1118 = vmatpush.msra.mxu0 0.0
      %1119 = vmatpush.msra.mxu0 0.0
      %1120 = vmatpush.msra.mxu0 0.0
      %1121 = vmatpush.msra.mxu0 0.0
      %1122 = vmatpush.msra.mxu0 0.0
      %1123 = vmatpush.msra.mxu0 0.0
      %1124 = vmatpush.msra.mxu0 0.0
      %1125 = vmatpush.msra.mxu0 0.0
      %1126 = vmatpush.msra.mxu0 0.0
      %1127 = vmatpush.msra.mxu0 0.0
      %1128 = vmatpush.msra.mxu0 0.0
      %1129 = vmatpush.msra.mxu0 %v1088
      %1130 = vmatmul.f32.gmra.mxu0 %v1092
      %v1131 = vpop.f32.mrf.mxu0
      %v1132 = vadd.f32 0.0, %v1131
      %1133 = vdwg.mxu0
      %v1134 = vadd.f32 %v1077, %v1112
      %v1135 = vadd.f32 %v1078, %v1132
      %s1136 = scalar_lea.vmem %s4, 32
      %v1137 = vld [vmem:[%s1136] sm:$0xff]
      %v1139 = vsel %vm347, %v1137, 0
      %1141 = vmatpush.msra.mxu0 0.0
      %1142 = vmatpush.msra.mxu0 0.0
      %1143 = vmatpush.msra.mxu0 0.0
      %1144 = vmatpush.msra.mxu0 0.0
      %1145 = vmatpush.msra.mxu0 0.0
      %1146 = vmatpush.msra.mxu0 0.0
      %1147 = vmatpush.msra.mxu0 0.0
      %1148 = vmatpush.msra.mxu0 0.0
      %1149 = vmatpush.msra.mxu0 0.0
      %1150 = vmatpush.msra.mxu0 0.0
      %1151 = vmatpush.msra.mxu0 0.0
      %1152 = vmatpush.msra.mxu0 0.0
      %1153 = vmatpush.msra.mxu0 0.0
      %1154 = vmatpush.msra.mxu0 0.0
      %1155 = vmatpush.msra.mxu0 0.0
      %1156 = vmatpush.msra.mxu0 %v900
      %1157 = vmatmul.f32.gmra.mxu0 %v1139
      %v1158 = vpop.f32.mrf.mxu0
      %v1159 = vadd.f32 0.0, %v1158
      %1160 = vdwg.mxu0
      %1161 = vmatpush.msra.mxu0 0.0
      %1162 = vmatpush.msra.mxu0 0.0
      %1163 = vmatpush.msra.mxu0 0.0
      %1164 = vmatpush.msra.mxu0 0.0
      %1165 = vmatpush.msra.mxu0 0.0
      %1166 = vmatpush.msra.mxu0 0.0
      %1167 = vmatpush.msra.mxu0 0.0
      %1168 = vmatpush.msra.mxu0 0.0
      %1169 = vmatpush.msra.mxu0 0.0
      %1170 = vmatpush.msra.mxu0 0.0
      %1171 = vmatpush.msra.mxu0 0.0
      %1172 = vmatpush.msra.mxu0 0.0
      %1173 = vmatpush.msra.mxu0 0.0
      %1174 = vmatpush.msra.mxu0 0.0
      %1175 = vmatpush.msra.mxu0 0.0
      %1176 = vmatpush.msra.mxu0 %v901
      %1177 = vmatmul.f32.gmra.mxu0 %v1139
      %v1178 = vpop.f32.mrf.mxu0
      %v1179 = vadd.f32 0.0, %v1178
      %1180 = vdwg.mxu0
      %v1181 = vadd.f32 %v1134, %v1159
      %v1182 = vadd.f32 %v1135, %v1179
      %v1183 = vld [vmem:[%s309 + $0x8] sm:$0xff]
      %v1184 = vld [vmem:[%s309 + $0x10] sm:$0xff]
      %v1185 = vld [vmem:[%s309 + $0x18] sm:$0xff]
      %s1186 = scalar_lea.vmem %s4, 40
      %v1187 = vld [vmem:[%s1186] sm:$0xff]
      %1191 = vrot.lane.b32.xlu0 %v1183, 127
      %v1192 = vpop.permute.xlu0 %1191
      %1193 = vrot.lane.b32.xlu0 %v1184, 127
      %v1194 = vpop.permute.xlu0 %1193
      %1195 = vrot.lane.b32.xlu0 %v1185, 127
      %v1196 = vpop.permute.xlu0 %1195
      %v1197 = vsel %vm631, %v1192, %v1194
      %v1198 = vsel %vm631, %v1194, %v1196
      %v1202 = vsel %vm347, %v1187, 0
      %1204 = vmatpush.msra.mxu0 0.0
      %1205 = vmatpush.msra.mxu0 0.0
      %1206 = vmatpush.msra.mxu0 0.0
      %1207 = vmatpush.msra.mxu0 0.0
      %1208 = vmatpush.msra.mxu0 0.0
      %1209 = vmatpush.msra.mxu0 0.0
      %1210 = vmatpush.msra.mxu0 0.0
      %1211 = vmatpush.msra.mxu0 0.0
      %1212 = vmatpush.msra.mxu0 0.0
      %1213 = vmatpush.msra.mxu0 0.0
      %1214 = vmatpush.msra.mxu0 0.0
      %1215 = vmatpush.msra.mxu0 0.0
      %1216 = vmatpush.msra.mxu0 0.0
      %1217 = vmatpush.msra.mxu0 0.0
      %1218 = vmatpush.msra.mxu0 0.0
      %1219 = vmatpush.msra.mxu0 %v1197
      %1220 = vmatmul.f32.gmra.mxu0 %v1202
      %v1221 = vpop.f32.mrf.mxu0
      %v1222 = vadd.f32 0.0, %v1221
      %1223 = vdwg.mxu0
      %1224 = vmatpush.msra.mxu0 0.0
      %1225 = vmatpush.msra.mxu0 0.0
      %1226 = vmatpush.msra.mxu0 0.0
      %1227 = vmatpush.msra.mxu0 0.0
      %1228 = vmatpush.msra.mxu0 0.0
      %1229 = vmatpush.msra.mxu0 0.0
      %1230 = vmatpush.msra.mxu0 0.0
      %1231 = vmatpush.msra.mxu0 0.0
      %1232 = vmatpush.msra.mxu0 0.0
      %1233 = vmatpush.msra.mxu0 0.0
      %1234 = vmatpush.msra.mxu0 0.0
      %1235 = vmatpush.msra.mxu0 0.0
      %1236 = vmatpush.msra.mxu0 0.0
      %1237 = vmatpush.msra.mxu0 0.0
      %1238 = vmatpush.msra.mxu0 0.0
      %1239 = vmatpush.msra.mxu0 %v1198
      %1240 = vmatmul.f32.gmra.mxu0 %v1202
      %v1241 = vpop.f32.mrf.mxu0
      %v1242 = vadd.f32 0.0, %v1241
      %1243 = vdwg.mxu0
      %v1244 = vadd.f32 %v1181, %v1222
      %v1245 = vadd.f32 %v1182, %v1242
      %v1246 = vld [vmem:[#allocation2 + $0x8] sm:$0xff]
      %v1247 = vld [vmem:[#allocation2 + $0x10] sm:$0xff]
      %v1248 = vld [vmem:[#allocation2 + $0x18] sm:$0xff]
      %s1249 = scalar_lea.vmem %s4, 48
      %v1250 = vld [vmem:[%s1249] sm:$0xff]
      %1254 = vrot.lane.b32.xlu0 %v1246, 113
      %v1255 = vpop.permute.xlu0 %1254
      %1256 = vrot.lane.b32.xlu0 %v1247, 113
      %v1257 = vpop.permute.xlu0 %1256
      %1258 = vrot.lane.b32.xlu0 %v1248, 113
      %v1259 = vpop.permute.xlu0 %1258
      %v1260 = vsel %vm695, %v1255, %v1257
      %v1261 = vsel %vm695, %v1257, %v1259
      %v1265 = vsel %vm347, %v1250, 0
      %1267 = vmatpush.msra.mxu0 0.0
      %1268 = vmatpush.msra.mxu0 0.0
      %1269 = vmatpush.msra.mxu0 0.0
      %1270 = vmatpush.msra.mxu0 0.0
      %1271 = vmatpush.msra.mxu0 0.0
      %1272 = vmatpush.msra.mxu0 0.0
      %1273 = vmatpush.msra.mxu0 0.0
      %1274 = vmatpush.msra.mxu0 0.0
      %1275 = vmatpush.msra.mxu0 0.0
      %1276 = vmatpush.msra.mxu0 0.0
      %1277 = vmatpush.msra.mxu0 0.0
      %1278 = vmatpush.msra.mxu0 0.0
      %1279 = vmatpush.msra.mxu0 0.0
      %1280 = vmatpush.msra.mxu0 0.0
      %1281 = vmatpush.msra.mxu0 0.0
      %1282 = vmatpush.msra.mxu0 %v1260
      %1283 = vmatmul.f32.gmra.mxu0 %v1265
      %v1284 = vpop.f32.mrf.mxu0
      %v1285 = vadd.f32 0.0, %v1284
      %1286 = vdwg.mxu0
      %1287 = vmatpush.msra.mxu0 0.0
      %1288 = vmatpush.msra.mxu0 0.0
      %1289 = vmatpush.msra.mxu0 0.0
      %1290 = vmatpush.msra.mxu0 0.0
      %1291 = vmatpush.msra.mxu0 0.0
      %1292 = vmatpush.msra.mxu0 0.0
      %1293 = vmatpush.msra.mxu0 0.0
      %1294 = vmatpush.msra.mxu0 0.0
      %1295 = vmatpush.msra.mxu0 0.0
      %1296 = vmatpush.msra.mxu0 0.0
      %1297 = vmatpush.msra.mxu0 0.0
      %1298 = vmatpush.msra.mxu0 0.0
      %1299 = vmatpush.msra.mxu0 0.0
      %1300 = vmatpush.msra.mxu0 0.0
      %1301 = vmatpush.msra.mxu0 0.0
      %1302 = vmatpush.msra.mxu0 %v1261
      %1303 = vmatmul.f32.gmra.mxu0 %v1265
      %v1304 = vpop.f32.mrf.mxu0
      %v1305 = vadd.f32 0.0, %v1304
      %1306 = vdwg.mxu0
      %v1307 = vadd.f32 %v1244, %v1285
      %v1308 = vadd.f32 %v1245, %v1305
      %v1309 = vld [vmem:[%s306 + $0x8] sm:$0xff]
      %v1310 = vld [vmem:[%s306 + $0x10] sm:$0xff]
      %v1311 = vld [vmem:[%s306 + $0x18] sm:$0xff]
      %s1312 = scalar_lea.vmem %s4, 56
      %v1313 = vld [vmem:[%s1312] sm:$0xff]
      %1317 = vrot.lane.b32.xlu0 %v1309, 112
      %v1318 = vpop.permute.xlu0 %1317
      %1319 = vrot.lane.b32.xlu0 %v1310, 112
      %v1320 = vpop.permute.xlu0 %1319
      %1321 = vrot.lane.b32.xlu0 %v1311, 112
      %v1322 = vpop.permute.xlu0 %1321
      %v1323 = vsel %vm759, %v1318, %v1320
      %v1324 = vsel %vm759, %v1320, %v1322
      %v1328 = vsel %vm347, %v1313, 0
      %1330 = vmatpush.msra.mxu0 0.0
      %1331 = vmatpush.msra.mxu0 0.0
      %1332 = vmatpush.msra.mxu0 0.0
      %1333 = vmatpush.msra.mxu0 0.0
      %1334 = vmatpush.msra.mxu0 0.0
      %1335 = vmatpush.msra.mxu0 0.0
      %1336 = vmatpush.msra.mxu0 0.0
      %1337 = vmatpush.msra.mxu0 0.0
      %1338 = vmatpush.msra.mxu0 0.0
      %1339 = vmatpush.msra.mxu0 0.0
      %1340 = vmatpush.msra.mxu0 0.0
      %1341 = vmatpush.msra.mxu0 0.0
      %1342 = vmatpush.msra.mxu0 0.0
      %1343 = vmatpush.msra.mxu0 0.0
      %1344 = vmatpush.msra.mxu0 0.0
      %1345 = vmatpush.msra.mxu0 %v1323
      %1346 = vmatmul.f32.gmra.mxu0 %v1328
      %v1347 = vpop.f32.mrf.mxu0
      %v1348 = vadd.f32 0.0, %v1347
      %1349 = vdwg.mxu0
      %1350 = vmatpush.msra.mxu0 0.0
      %1351 = vmatpush.msra.mxu0 0.0
      %1352 = vmatpush.msra.mxu0 0.0
      %1353 = vmatpush.msra.mxu0 0.0
      %1354 = vmatpush.msra.mxu0 0.0
      %1355 = vmatpush.msra.mxu0 0.0
      %1356 = vmatpush.msra.mxu0 0.0
      %1357 = vmatpush.msra.mxu0 0.0
      %1358 = vmatpush.msra.mxu0 0.0
      %1359 = vmatpush.msra.mxu0 0.0
      %1360 = vmatpush.msra.mxu0 0.0
      %1361 = vmatpush.msra.mxu0 0.0
      %1362 = vmatpush.msra.mxu0 0.0
      %1363 = vmatpush.msra.mxu0 0.0
      %1364 = vmatpush.msra.mxu0 0.0
      %1365 = vmatpush.msra.mxu0 %v1324
      %1366 = vmatmul.f32.gmra.mxu0 %v1328
      %v1367 = vpop.f32.mrf.mxu0
      %v1368 = vadd.f32 0.0, %v1367
      %1369 = vdwg.mxu0
      %v1370 = vadd.f32 %v1307, %v1348
      %v1371 = vadd.f32 %v1308, %v1368
      %s1372 = scalar_lea.vmem %s4, 64
      %v1373 = vld [vmem:[%s1372] sm:$0xff]
      %1374 = vrot.lane.b32.xlu0 %v1183, 111
      %v1375 = vpop.permute.xlu0 %1374
      %1376 = vrot.lane.b32.xlu0 %v1184, 111
      %v1377 = vpop.permute.xlu0 %1376
      %1378 = vrot.lane.b32.xlu0 %v1185, 111
      %v1379 = vpop.permute.xlu0 %1378
      %v1380 = vsel %vm817, %v1375, %v1377
      %v1381 = vsel %vm817, %v1377, %v1379
      %v1385 = vsel %vm347, %v1373, 0
      %1387 = vmatpush.msra.mxu0 0.0
      %1388 = vmatpush.msra.mxu0 0.0
      %1389 = vmatpush.msra.mxu0 0.0
      %1390 = vmatpush.msra.mxu0 0.0
      %1391 = vmatpush.msra.mxu0 0.0
      %1392 = vmatpush.msra.mxu0 0.0
      %1393 = vmatpush.msra.mxu0 0.0
      %1394 = vmatpush.msra.mxu0 0.0
      %1395 = vmatpush.msra.mxu0 0.0
      %1396 = vmatpush.msra.mxu0 0.0
      %1397 = vmatpush.msra.mxu0 0.0
      %1398 = vmatpush.msra.mxu0 0.0
      %1399 = vmatpush.msra.mxu0 0.0
      %1400 = vmatpush.msra.mxu0 0.0
      %1401 = vmatpush.msra.mxu0 0.0
      %1402 = vmatpush.msra.mxu0 %v1380
      %1403 = vmatmul.f32.gmra.mxu0 %v1385
      %v1404 = vpop.f32.mrf.mxu0
      %v1405 = vadd.f32 0.0, %v1404
      %1406 = vdwg.mxu0
      %1407 = vmatpush.msra.mxu0 0.0
      %1408 = vmatpush.msra.mxu0 0.0
      %1409 = vmatpush.msra.mxu0 0.0
      %1410 = vmatpush.msra.mxu0 0.0
      %1411 = vmatpush.msra.mxu0 0.0
      %1412 = vmatpush.msra.mxu0 0.0
      %1413 = vmatpush.msra.mxu0 0.0
      %1414 = vmatpush.msra.mxu0 0.0
      %1415 = vmatpush.msra.mxu0 0.0
      %1416 = vmatpush.msra.mxu0 0.0
      %1417 = vmatpush.msra.mxu0 0.0
      %1418 = vmatpush.msra.mxu0 0.0
      %1419 = vmatpush.msra.mxu0 0.0
      %1420 = vmatpush.msra.mxu0 0.0
      %1421 = vmatpush.msra.mxu0 0.0
      %1422 = vmatpush.msra.mxu0 %v1381
      %1423 = vmatmul.f32.gmra.mxu0 %v1385
      %v1424 = vpop.f32.mrf.mxu0
      %v1425 = vadd.f32 0.0, %v1424
      %1426 = vdwg.mxu0
      %v1427 = vadd.f32 %v1370, %v1405
      %v1428 = vadd.f32 %v1371, %v1425
      %v1429 = vld [vmem:[%s5] sm:$0xff]
      %1431 = vset.pattern.permute.xlu0 0
      %1432 = vperm.xlu0 %1431, %v1429
      %v1433 = vpop.permute.xlu0 %1432
      %v1435 = vmul.f32 %v1427, %v1433
      %v1436 = vmul.f32 %v1428, %v1433
      %v1437 = vld [vmem:[%s6] sm:$0xff]
      %1439 = vset.pattern.permute.xlu0 0
      %1440 = vperm.xlu0 %1439, %v1437
      %v1441 = vpop.permute.xlu0 %1440
      %v1443 = vadd.f32 %v1435, %v1441
      %v1444 = vadd.f32 %v1436, %v1441
      %v1445 = vmax.f32 %v1443, 0.0
      %v1446 = vmax.f32 %v1444, 0.0
      %1447 = vst [vmem:[%s278] sm:$0xff] %v1445
      %1448 = vst [vmem:[%s278 + $0x8] sm:$0xff] %v1446
      %p1449 = scmp.lt.s32.totalorder %s18, 1
      %s1450 = scalar_select %p1449, %s18, 1
      %s1451 = smul.addr %s1450, 2
      %s1452 = smul.addr %s1451, 8
      %s1453 = scalar_lea.vmem %s7, %s1452
      // Predicated region
      $region49: #{residual_block_apply.1} parent=47 // pred_check
        %p1454 = pneg %p188
      $region50: #{residual_block_apply.1} parent=47 // pred_check_branch
        %1456 = sbr.rel (%p1454) target = $region52
      $region51: #{residual_block_apply.1} parent=47 // pred_region
        _
      $region52: #{residual_block_apply.1} parent=47 // pred_fallthru
        _
    $region48: #{residual_block_apply.1} parent=5 // pred_fallthru
      _
    %p1457 = scmp.le.s32.totalorder 2, %s13
    // Predicated region
    $region53: #{residual_block_apply.1} parent=5 // pred_check
      %p1458 = pneg %p1457
    $region54: #{residual_block_apply.1} parent=5 // pred_check_branch
      %1460 = sbr.rel (%p1458) target = $region56
    $region55: #{residual_block_apply.1} parent=5 // pred_region
      %s1461 = ssub.s32 %s13, 2
      // Predicated region
      $region57: #{residual_block_apply.1} parent=55 // pred_check
        %p1462 = pneg %p194
      $region58: #{residual_block_apply.1} parent=55 // pred_check_branch
        %1464 = sbr.rel (%p1462) target = $region60
      $region59: #{residual_block_apply.1} parent=55 // pred_region
        %p1465 = scmp.lt.s32.totalorder %s19, 1
        %s1466 = scalar_select %p1465, %s19, 1
        %s1467 = smul.addr %s1466, 2
        %s1468 = smul.addr %s1467, 8
        %s1469 = scalar_lea.vmem %s7, %s1468
      $region60: #{residual_block_apply.1} parent=55 // pred_fallthru
        _
    $region56: #{residual_block_apply.1} parent=5 // pred_fallthru
      _
  $region6: #{residual_block_apply.1} parent=0 // loop_footer
    %s17 = sadd.s32 1, %s13
  $region7: #{residual_block_apply.1} parent=0 // loop_footer_branch
    %12 = sbr.rel target = $region3
  $region8: #{residual_block_apply.1} parent=0 // loop_exit
    _

</llo_original>
